<compile_context>
chip_gen: v6e
topology: v6e:2x2x1
jax: 0.10.0
libtpu: 0.0.40
codegen_flags: <defaults>
</compile_context>

<pallas_src>
import functools
import math

import jax
import jax.numpy as jnp
from jax.experimental import pallas as pl
from jax.experimental.pallas import tpu as pltpu


_SQRT2 = math.sqrt(2.0)


def _gelu_exact(x):
    # F.gelu default = exact erf formulation
    return 0.5 * x * (1.0 + jax.lax.erf(x / _SQRT2))


def _round_up(x, m):
    return (x + m - 1) // m * m


def _device_info():
    """Best-effort (vmem_capacity_bytes, tensorcores_per_device); safe fallbacks."""
    vmem_cap = 64 * 1024 * 1024          # conservative default: v7x per-TC VMEM
    n_cores = 1
    try:
        info = pltpu.get_tpu_info()
        vmem_cap = int(getattr(info, "vmem_capacity_bytes", vmem_cap) or vmem_cap)
        n_cores = int(getattr(info, "num_cores", n_cores) or n_cores)
    except Exception:
        pass
    try:
        n_cores = max(n_cores, int(getattr(jax.devices()[0], "num_cores", 1) or 1))
    except Exception:
        pass
    return vmem_cap, n_cores


def bert_lm_head_kernel(x_ref, w1_ref, b1_ref, lnw_ref, lnb_ref,
                        w2_ref, b2_ref, o_ref, h_scratch, *, eps):
    # Grid is (M_tiles, V_tiles); Pallas iterates the last grid axis innermost and
    # sequentially, so the dense+GELU+LayerNorm result written to h_scratch at j == 0
    # stays live in VMEM and is reused by every vocab tile of the same M stripe.
    # (Do NOT reorder the grid to (V_tiles, M_tiles) -- the scratch would go stale.)
    @pl.when(pl.program_id(1) == 0)
    def _():
        h = jnp.dot(x_ref[...], w1_ref[...],
                    preferred_element_type=jnp.float32) + b1_ref[...]
        h = _gelu_exact(h)
        mean = jnp.mean(h, axis=-1, keepdims=True)
        var = jnp.mean(jnp.square(h - mean), axis=-1, keepdims=True)
        h = (h - mean) * jax.lax.rsqrt(var + eps)
        h = h * lnw_ref[...] + lnb_ref[...]
        # TODO(synk): ln_w/ln_b could be pre-folded into dec_w/dec_b offline; the affine
        # runs once per M stripe on otherwise-idle VPU slots, so it is left in-kernel.
        h_scratch[...] = h.astype(h_scratch.dtype)

    logits = jnp.dot(h_scratch[...], w2_ref[...],
                     preferred_element_type=jnp.float32) + b2_ref[...]
    o_ref[...] = logits.astype(o_ref.dtype)


def prepare_params(params, *, compute_dtype=jnp.bfloat16, tv=1024):
    """One-time weight preparation (transpose / cast / vocab-pad).

    Call this ONCE at parameter-load time and pass the result to `bert_lm_head`.
    Doing it per forward call would re-transpose/cast/pad the full [D, V] decoder
    weight in HBM on every step.
    """
    V, D = params["dec_w"].shape
    compute_dtype = jnp.dtype(compute_dtype)
    tv = min(int(tv), _round_up(V, 128))
    tv = max(128, _round_up(tv, 128))
    Vp = _round_up(V, tv)

    w2_t = params["dec_w"].T.astype(compute_dtype)            # [D, V] (in, out)
    b2 = params["dec_b"].astype(jnp.float32)[None, :]          # [1, V]
    if Vp != V:
        w2_t = jnp.pad(w2_t, ((0, 0), (0, Vp - V)))
        b2 = jnp.pad(b2, ((0, 0), (0, Vp - V)))

    return {
        "w1_t": params["dense_w"].T.astype(compute_dtype),     # [D, D] (in, out)
        "b1": params["dense_b"].astype(jnp.float32)[None, :],  # [1, D]
        "lnw": params["ln_w"].astype(jnp.float32)[None, :],    # [1, D]
        "lnb": params["ln_b"].astype(jnp.float32)[None, :],    # [1, D]
        "w2_t": w2_t,                                          # [D, Vp]
        "b2": b2,                                              # [1, Vp]
        "tv": tv,
        "vocab_size": V,
        "compute_dtype": compute_dtype,
    }


def bert_lm_head(hidden_states, params, *, norm_eps=1e-12, tm=None, tv=1024,
                 compute_dtype=None, out_dtype=None, trim_padded_vocab=True):
    """hidden_states: [B, S, D] -> logits [B, S, V] (or [B, S, Vp] if not trimming).

    params: either the raw module params (dense_w [D,D], dense_b, ln_w, ln_b,
      dec_w [V,D], dec_b) or -- preferred for performance -- the output of
      `prepare_params` (weights pre-transposed / pre-cast / vocab-padded once).
    compute_dtype: dtype for x / dense_w / dec_w / scratch. Default bf16 (halves weight
      HBM traffic, bf16-native MXU). Accumulation, biases and GELU/LN math stay f32.
    out_dtype: logits dtype. Default bf16 when the input is f32 (halves the dominant
      [M, V] logits writeback); pass jnp.float32 for exact-f32 logits.
    trim_padded_vocab: if False, return the Vp-padded logits (padded columns are exactly
      zero; mask ids >= vocab_size downstream) and skip the post-call column-slice copy.
    """
    B, S, D = hidden_states.shape
    M = B * S
    in_dtype = hidden_states.dtype

    prepared = isinstance(params, dict) and "w2_t" in params
    if prepared:
        prep = params
    else:
        cd = jnp.bfloat16 if compute_dtype is None else compute_dtype
        prep = prepare_params(params, compute_dtype=cd, tv=(tv if tv else 1024))

    compute_dtype = jnp.dtype(prep["compute_dtype"])
    if out_dtype is None:
        out_dtype = jnp.bfloat16 if in_dtype == jnp.dtype(jnp.float32) else in_dtype
    out_dtype = jnp.dtype(out_dtype)

    V = prep["vocab_size"]
    Vp = prep["w2_t"].shape[1]
    assert prep["w1_t"].shape == (D, D)
    if tv is None or tv % 128 != 0 or tv <= 0 or Vp % tv != 0:
        tv = prep["tv"]

    vmem_cap, n_cores = _device_info()

    # Tile selection: large M stripes (fewer passes over the [D, Vp] decoder weight),
    # (8, 128)-aligned, clamped to the padded problem.
    if tm is None:
        tm = min(1024, _round_up(M, 8))
    tm = max(8, _round_up(int(tm), 8))
    Mp = _round_up(M, tm)
    # v7x megacore: the "parallel" M axis is what gets sharded across the 2 TensorCores;
    # make sure it has >= 2 stripes there. Single-core chips keep one stripe.
    if n_cores >= 2 and Mp // tm < 2 and tm > 8:
        tm = max(8, _round_up((tm + 1) // 2, 8))
        Mp = _round_up(M, tm)

    x = hidden_states.reshape(M, D).astype(compute_dtype)
    if Mp != M:
        x = jnp.pad(x, ((0, Mp - M), (0, 0)))

    # VMEM budget: double-buffered streamed tiles + resident weights + scratch.
    # (No extra 2x multiplier -- double-buffering is already counted.)  Capped at
    # 90% of the device's physical VMEM (v7x: 64 MiB/TC).
    cb = compute_dtype.itemsize
    ob = out_dtype.itemsize
    vmem_est = (2 * tm * D * cb          # x tile (double-buffered)
                + 2 * D * D * cb         # dense weight (worst case: 2 buffers)
                + 2 * D * tv * cb        # decoder weight tile
                + 2 * tm * tv * ob       # output tile
                + tm * D * cb            # h scratch
                + 2 * (3 * D + tv + 64) * 4)  # biases / LN params
    vmem_limit = int(min(int(0.9 * vmem_cap),
                         max(32 * 1024 * 1024, vmem_est + (8 << 20))))

    kernel = functools.partial(bert_lm_head_kernel, eps=float(norm_eps))
    grid = (Mp // tm, Vp // tv)

    def _in_specs(single_buffer_resident):
        # Grid-invariant inputs (constant index_map): no re-DMA across steps; with
        # pipeline_mode=pl.Buffered(1) they also stop double-allocating VMEM.
        ck = dict(pipeline_mode=pl.Buffered(1)) if single_buffer_resident else {}
        return [
            pl.BlockSpec((tm, D), lambda i, j: (i, 0)),             # x tile
            pl.BlockSpec((D, D), lambda i, j: (0, 0), **ck),        # dense weight
            pl.BlockSpec((1, D), lambda i, j: (0, 0), **ck),        # dense bias
            pl.BlockSpec((1, D), lambda i, j: (0, 0), **ck),        # LN weight
            pl.BlockSpec((1, D), lambda i, j: (0, 0), **ck),        # LN bias
            # NOTE: bump to pipeline_mode=pl.Buffered(3) on v6e if profiling shows
            # exposed DMA behind the long j==0 (dense+GELU+LN) step.
            pl.BlockSpec((D, tv), lambda i, j: (0, j)),             # decoder weight tile
            pl.BlockSpec((1, tv), lambda i, j: (0, j)),             # decoder bias tile
        ]

    def _call(single_buffer_resident):
        return pl.pallas_call(
            kernel,
            out_shape=jax.ShapeDtypeStruct((Mp, Vp), out_dtype),
            grid_spec=pltpu.PrefetchScalarGridSpec(
                num_scalar_prefetch=0,
                grid=grid,
                in_specs=_in_specs(single_buffer_resident),
                out_specs=pl.BlockSpec((tm, tv), lambda i, j: (i, j)),
                scratch_shapes=[pltpu.VMEM((tm, D), compute_dtype)],
            ),
            compiler_params=pltpu.CompilerParams(
                dimension_semantics=("parallel", "arbitrary"),
                vmem_limit_bytes=vmem_limit),
        )(x, prep["w1_t"], prep["b1"], prep["lnw"], prep["lnb"],
          prep["w2_t"], prep["b2"])

    try:
        out = _call(True)
    except Exception:
        # pipeline_mode=Buffered(1) not supported by this jax/Mosaic version -> default
        # double-buffering of the small resident inputs (costs a little VMEM only).
        out = _call(False)

    out = out[:M] if Mp != M else out
    if trim_padded_vocab:
        if Vp != V:
            out = out[:, :V]
        return out.reshape(B, S, V)
    return out.reshape(B, S, Vp)


def reference(hidden_states, params, norm_eps):
    h = hidden_states @ params["dense_w"].T + params["dense_b"]
    h = _gelu_exact(h)
    mean = jnp.mean(h, axis=-1, keepdims=True)
    var = jnp.mean(jnp.square(h - mean), axis=-1, keepdims=True)
    h = (h - mean) * jax.lax.rsqrt(var + norm_eps) * params["ln_w"] + params["ln_b"]
    return h @ params["dec_w"].T + params["dec_b"]


if __name__ == "__main__":
    # Small shapes, deliberately not multiples of the tile sizes, to exercise the
    # padding path and the multi-tile grid (scratch reuse across vocab tiles).
    B, S, D, V = 2, 9, 128, 300
    norm_eps = 1e-12

    key = jax.random.PRNGKey(0)
    ks = jax.random.split(key, 6)
    hidden = jax.random.normal(ks[0], (B, S, D), dtype=jnp.float32)
    params = {
        "dense_w": jax.random.normal(ks[1], (D, D), dtype=jnp.float32) * 0.02,
        "dense_b": jax.random.normal(ks[2], (D,), dtype=jnp.float32) * 0.02,
        "ln_w": jnp.ones((D,), dtype=jnp.float32),
        "ln_b": jnp.zeros((D,), dtype=jnp.float32),
        "dec_w": jax.random.normal(ks[3], (V, D), dtype=jnp.float32) * 0.02,
        "dec_b": jax.random.normal(ks[4], (V,), dtype=jnp.float32) * 0.02,
    }

    # TODO(synk): the optional `input_embedding.projection(h) + decoder.bias`
    # tied-embedding branch is not implemented; this covers the default decoder path.

    ref = reference(hidden, params, norm_eps)

    # 1) Production path: prepare weights once (bf16), default (bf16) compute + logits.
    prep = prepare_params(params)            # one-time transpose / cast / vocab pad
    logits_bf16 = bert_lm_head(hidden, prep, norm_eps=norm_eps)
    logits_bf16 = jax.block_until_ready(logits_bf16)
    assert logits_bf16.shape == (B, S, V)
    assert logits_bf16.dtype == jnp.bfloat16
    err = float(jnp.max(jnp.abs(logits_bf16.astype(jnp.float32) - ref)))
    assert err < 5e-2, err                   # bf16 weights/activations/logits tolerance

    # 1b) Padded-vocab output (no column-slice copy); padded columns are exactly zero.
    logits_pad = bert_lm_head(hidden, prep, norm_eps=norm_eps, trim_padded_vocab=False)
    logits_pad = jax.block_until_ready(logits_pad)
    assert logits_pad.shape[-1] == prep["w2_t"].shape[1]
    assert jnp.array_equal(logits_pad[..., :V], logits_bf16)

    # 2) Exact-f32 path from raw params, explicit small tiles -> multi-step grid on
    #    both axes (padding + scratch reuse across vocab tiles), tight tolerance.
    logits_f32 = bert_lm_head(hidden, params, norm_eps=norm_eps,
                              compute_dtype=jnp.float32, out_dtype=jnp.float32,
                              tm=8, tv=128)
    logits_f32 = jax.block_until_ready(logits_f32)
    assert logits_f32.shape == (B, S, V)
    err32 = float(jnp.max(jnp.abs(logits_f32 - ref)))
    assert err32 < 1e-4, err32

    print("KERNEL_OK")
</pallas_src>

<mosaic_0001>
module attributes {stable_mosaic.version = 11 : i64} {
  func.func @bert_lm_head_kernel(%arg0: i32, %arg1: i32, %arg2: memref<24x128xbf16, #tpu.memory_space<vmem>>, %arg3: memref<128x128xbf16, #tpu.memory_space<vmem>>, %arg4: memref<1x128xf32, #tpu.memory_space<vmem>>, %arg5: memref<1x128xf32, #tpu.memory_space<vmem>>, %arg6: memref<1x128xf32, #tpu.memory_space<vmem>>, %arg7: memref<128x384xbf16, #tpu.memory_space<vmem>>, %arg8: memref<1x384xf32, #tpu.memory_space<vmem>>, %arg9: memref<24x384xbf16, #tpu.memory_space<vmem>>, %arg10: memref<24x128xbf16, #tpu.memory_space<vmem>>) attributes {dimension_semantics = [#tpu.dimension_semantics<parallel>, #tpu.dimension_semantics<arbitrary>], iteration_bounds = array<i64: 1, 1>, scalar_prefetch = 0 : i64, scratch_operands = 1 : i64, tpu.core_type = #tpu.core_type<tc>, window_params = [{transform_indices = @transform_0, window_bounds = array<i64: 24, 128>}, {pipeline_mode = #tpu.pipeline_mode<synchronous>, transform_indices = @transform_1, window_bounds = array<i64: 128, 128>}, {pipeline_mode = #tpu.pipeline_mode<synchronous>, transform_indices = @transform_2, window_bounds = array<i64: 1, 128>}, {pipeline_mode = #tpu.pipeline_mode<synchronous>, transform_indices = @transform_3, window_bounds = array<i64: 1, 128>}, {pipeline_mode = #tpu.pipeline_mode<synchronous>, transform_indices = @transform_4, window_bounds = array<i64: 1, 128>}, {transform_indices = @transform_5, window_bounds = array<i64: 128, 384>}, {transform_indices = @transform_6, window_bounds = array<i64: 1, 384>}, {transform_indices = @transform_7, window_bounds = array<i64: 24, 384>}]} {
    %c0_i32 = arith.constant 0 : i32
    %0 = arith.cmpi eq, %arg1, %c0_i32 : i32
    %1 = arith.extui %0 : i1 to i32
    %c0_i32_0 = arith.constant 0 : i32
    %2 = arith.cmpi ne, %1, %c0_i32_0 : i32
    scf.if %2 {
      %c0_8 = arith.constant 0 : index
      %c0_9 = arith.constant 0 : index
      %11 = vector.load %arg2[%c0_8, %c0_9] : memref<24x128xbf16, #tpu.memory_space<vmem>>, vector<24x128xbf16>
      %c0_10 = arith.constant 0 : index
      %c0_11 = arith.constant 0 : index
      %12 = vector.load %arg3[%c0_10, %c0_11] : memref<128x128xbf16, #tpu.memory_space<vmem>>, vector<128x128xbf16>
      %cst_12 = arith.constant dense<0.000000e+00> : vector<24x128xf32>
      %13 = tpu.matmul %11, %12, %cst_12 {dimension_numbers = #tpu.dot_dimension_numbers<[1], [0], [0], [1], [0, 0, 1, 1], [], []>} : vector<24x128xbf16>, vector<128x128xbf16>, vector<24x128xf32> -> vector<24x128xf32>
      %c0_13 = arith.constant 0 : index
      %c0_14 = arith.constant 0 : index
      %14 = vector.load %arg4[%c0_13, %c0_14] : memref<1x128xf32, #tpu.memory_space<vmem>>, vector<1x128xf32>
      %15 = vector.broadcast %14 : vector<1x128xf32> to vector<24x128xf32>
      %16 = arith.addf %13, %15 : vector<24x128xf32>
      %cst_15 = arith.constant 5.000000e-01 : f32
      %17 = vector.broadcast %cst_15 : f32 to vector<24x128xf32>
      %18 = arith.mulf %17, %16 : vector<24x128xf32>
      %cst_16 = arith.constant 1.41421354 : f32
      %19 = vector.broadcast %cst_16 : f32 to vector<24x128xf32>
      %20 = arith.divf %16, %19 : vector<24x128xf32>
      %21 = math.erf %20 : vector<24x128xf32>
      %cst_17 = arith.constant 1.000000e+00 : f32
      %22 = vector.broadcast %cst_17 : f32 to vector<24x128xf32>
      %23 = arith.addf %22, %21 : vector<24x128xf32>
      %24 = arith.mulf %18, %23 : vector<24x128xf32>
      %cst_18 = arith.constant dense<0.000000e+00> : vector<24xf32>
      %25 = vector.multi_reduction <add>, %24, %cst_18 [1] : vector<24x128xf32> to vector<24xf32>
      %26 = vector.shape_cast %25 : vector<24xf32> to vector<24x1xf32>
      %cst_19 = arith.constant 1.280000e+02 : f32
      %27 = vector.broadcast %cst_19 : f32 to vector<24x1xf32>
      %28 = arith.divf %26, %27 : vector<24x1xf32>
      %29 = vector.broadcast %28 : vector<24x1xf32> to vector<24x128xf32>
      %30 = arith.subf %24, %29 : vector<24x128xf32>
      %31 = arith.mulf %30, %30 : vector<24x128xf32>
      %cst_20 = arith.constant dense<0.000000e+00> : vector<24xf32>
      %32 = vector.multi_reduction <add>, %31, %cst_20 [1] : vector<24x128xf32> to vector<24xf32>
      %33 = vector.shape_cast %32 : vector<24xf32> to vector<24x1xf32>
      %cst_21 = arith.constant 1.280000e+02 : f32
      %34 = vector.broadcast %cst_21 : f32 to vector<24x1xf32>
      %35 = arith.divf %33, %34 : vector<24x1xf32>
      %36 = vector.broadcast %28 : vector<24x1xf32> to vector<24x128xf32>
      %37 = arith.subf %24, %36 : vector<24x128xf32>
      %cst_22 = arith.constant 9.99999996E-13 : f32
      %38 = vector.broadcast %cst_22 : f32 to vector<24x1xf32>
      %39 = arith.addf %35, %38 : vector<24x1xf32>
      %40 = math.rsqrt %39 : vector<24x1xf32>
      %41 = vector.broadcast %40 : vector<24x1xf32> to vector<24x128xf32>
      %42 = arith.mulf %37, %41 : vector<24x128xf32>
      %c0_23 = arith.constant 0 : index
      %c0_24 = arith.constant 0 : index
      %43 = vector.load %arg5[%c0_23, %c0_24] : memref<1x128xf32, #tpu.memory_space<vmem>>, vector<1x128xf32>
      %44 = vector.broadcast %43 : vector<1x128xf32> to vector<24x128xf32>
      %45 = arith.mulf %42, %44 : vector<24x128xf32>
      %c0_25 = arith.constant 0 : index
      %c0_26 = arith.constant 0 : index
      %46 = vector.load %arg6[%c0_25, %c0_26] : memref<1x128xf32, #tpu.memory_space<vmem>>, vector<1x128xf32>
      %47 = vector.broadcast %46 : vector<1x128xf32> to vector<24x128xf32>
      %48 = arith.addf %45, %47 : vector<24x128xf32>
      %49 = arith.truncf %48 : vector<24x128xf32> to vector<24x128xbf16>
      %c0_27 = arith.constant 0 : index
      %c0_28 = arith.constant 0 : index
      %50 = vector.load %arg10[%c0_27, %c0_28] : memref<24x128xbf16, #tpu.memory_space<vmem>>, vector<24x128xbf16>
      tpu.vector_store %arg10[%c0_27, %c0_28], %49 {strides = array<i32>} : memref<24x128xbf16, #tpu.memory_space<vmem>>, vector<24x128xbf16>,
    } else {
    }
    %c0 = arith.constant 0 : index
    %c0_1 = arith.constant 0 : index
    %3 = vector.load %arg10[%c0, %c0_1] : memref<24x128xbf16, #tpu.memory_space<vmem>>, vector<24x128xbf16>
    %c0_2 = arith.constant 0 : index
    %c0_3 = arith.constant 0 : index
    %4 = vector.load %arg7[%c0_2, %c0_3] : memref<128x384xbf16, #tpu.memory_space<vmem>>, vector<128x384xbf16>
    %cst = arith.constant dense<0.000000e+00> : vector<24x384xf32>
    %5 = tpu.matmul %3, %4, %cst {dimension_numbers = #tpu.dot_dimension_numbers<[1], [0], [0], [1], [0, 0, 1, 1], [], []>} : vector<24x128xbf16>, vector<128x384xbf16>, vector<24x384xf32> -> vector<24x384xf32>
    %c0_4 = arith.constant 0 : index
    %c0_5 = arith.constant 0 : index
    %6 = vector.load %arg8[%c0_4, %c0_5] : memref<1x384xf32, #tpu.memory_space<vmem>>, vector<1x384xf32>
    %7 = vector.broadcast %6 : vector<1x384xf32> to vector<24x384xf32>
    %8 = arith.addf %5, %7 : vector<24x384xf32>
    %9 = arith.truncf %8 : vector<24x384xf32> to vector<24x384xbf16>
    %c0_6 = arith.constant 0 : index
    %c0_7 = arith.constant 0 : index
    %10 = vector.load %arg9[%c0_6, %c0_7] : memref<24x384xbf16, #tpu.memory_space<vmem>>, vector<24x384xbf16>
    tpu.vector_store %arg9[%c0_6, %c0_7], %9 {strides = array<i32>} : memref<24x384xbf16, #tpu.memory_space<vmem>>, vector<24x384xbf16>,
    return
  }
  func.func @transform_0(%arg0: i32, %arg1: i32) -> (i32, i32) {
    %c0_i32 = arith.constant 0 : i32
    %c0_i32_0 = arith.constant 0 : i32
    return %arg0, %c0_i32 : i32, i32
  }
  func.func @transform_1(%arg0: i32, %arg1: i32) -> (i32, i32) {
    %c0_i32 = arith.constant 0 : i32
    %c0_i32_0 = arith.constant 0 : i32
    %c0_i32_1 = arith.constant 0 : i32
    return %c0_i32, %c0_i32_0 : i32, i32
  }
  func.func @transform_2(%arg0: i32, %arg1: i32) -> (i32, i32) {
    %c0_i32 = arith.constant 0 : i32
    %c0_i32_0 = arith.constant 0 : i32
    %c0_i32_1 = arith.constant 0 : i32
    return %c0_i32, %c0_i32_0 : i32, i32
  }
  func.func @transform_3(%arg0: i32, %arg1: i32) -> (i32, i32) {
    %c0_i32 = arith.constant 0 : i32
    %c0_i32_0 = arith.constant 0 : i32
    %c0_i32_1 = arith.constant 0 : i32
    return %c0_i32, %c0_i32_0 : i32, i32
  }
  func.func @transform_4(%arg0: i32, %arg1: i32) -> (i32, i32) {
    %c0_i32 = arith.constant 0 : i32
    %c0_i32_0 = arith.constant 0 : i32
    %c0_i32_1 = arith.constant 0 : i32
    return %c0_i32, %c0_i32_0 : i32, i32
  }
  func.func @transform_5(%arg0: i32, %arg1: i32) -> (i32, i32) {
    %c0_i32 = arith.constant 0 : i32
    %c0_i32_0 = arith.constant 0 : i32
    return %c0_i32, %arg1 : i32, i32
  }
  func.func @transform_6(%arg0: i32, %arg1: i32) -> (i32, i32) {
    %c0_i32 = arith.constant 0 : i32
    %c0_i32_0 = arith.constant 0 : i32
    return %c0_i32, %arg1 : i32, i32
  }
  func.func @transform_7(%arg0: i32, %arg1: i32) -> (i32, i32) {
    %c0_i32 = arith.constant 0 : i32
    return %arg0, %arg1 : i32, i32
  }
}

module attributes {stable_mosaic.version = 11 : i64} {
  func.func @bert_lm_head_kernel(%arg0: i32, %arg1: i32, %arg2: memref<24x128xbf16, #tpu.memory_space<vmem>>, %arg3: memref<128x128xbf16, #tpu.memory_space<vmem>>, %arg4: memref<1x128xf32, #tpu.memory_space<vmem>>, %arg5: memref<1x128xf32, #tpu.memory_space<vmem>>, %arg6: memref<1x128xf32, #tpu.memory_space<vmem>>, %arg7: memref<128x384xbf16, #tpu.memory_space<vmem>>, %arg8: memref<1x384xf32, #tpu.memory_space<vmem>>, %arg9: memref<24x384xbf16, #tpu.memory_space<vmem>>, %arg10: memref<24x128xbf16, #tpu.memory_space<vmem>>) attributes {dimension_semantics = [#tpu.dimension_semantics<parallel>, #tpu.dimension_semantics<arbitrary>], iteration_bounds = array<i64: 1, 1>, scalar_prefetch = 0 : i64, scratch_operands = 1 : i64, tpu.core_type = #tpu.core_type<tc>, window_params = [{transform_indices = @transform_0, window_bounds = array<i64: 24, 128>}, {pipeline_mode = #tpu.pipeline_mode<synchronous>, transform_indices = @transform_1, window_bounds = array<i64: 128, 128>}, {pipeline_mode = #tpu.pipeline_mode<synchronous>, transform_indices = @transform_2, window_bounds = array<i64: 1, 128>}, {pipeline_mode = #tpu.pipeline_mode<synchronous>, transform_indices = @transform_3, window_bounds = array<i64: 1, 128>}, {pipeline_mode = #tpu.pipeline_mode<synchronous>, transform_indices = @transform_4, window_bounds = array<i64: 1, 128>}, {transform_indices = @transform_5, window_bounds = array<i64: 128, 384>}, {transform_indices = @transform_6, window_bounds = array<i64: 1, 384>}, {transform_indices = @transform_7, window_bounds = array<i64: 24, 384>}]} {
    %c0_i32 = arith.constant 0 : i32
    %0 = arith.cmpi eq, %arg1, %c0_i32 : i32
    %1 = arith.extui %0 : i1 to i32
    %c0_i32_0 = arith.constant 0 : i32
    %2 = arith.cmpi ne, %1, %c0_i32_0 : i32
    scf.if %2 {
      %c0_8 = arith.constant 0 : index
      %c0_9 = arith.constant 0 : index
      %11 = vector.load %arg2[%c0_8, %c0_9] : memref<24x128xbf16, #tpu.memory_space<vmem>>, vector<24x128xbf16>
      %c0_10 = arith.constant 0 : index
      %c0_11 = arith.constant 0 : index
      %12 = vector.load %arg3[%c0_10, %c0_11] : memref<128x128xbf16, #tpu.memory_space<vmem>>, vector<128x128xbf16>
      %cst_12 = arith.constant dense<0.000000e+00> : vector<24x128xf32>
      %13 = tpu.matmul %11, %12, %cst_12 {dimension_numbers = #tpu.dot_dimension_numbers<[1], [0], [0], [1], [0, 0, 1, 1], [], []>} : vector<24x128xbf16>, vector<128x128xbf16>, vector<24x128xf32> -> vector<24x128xf32>
      %c0_13 = arith.constant 0 : index
      %c0_14 = arith.constant 0 : index
      %14 = vector.load %arg4[%c0_13, %c0_14] : memref<1x128xf32, #tpu.memory_space<vmem>>, vector<1x128xf32>
      %15 = vector.broadcast %14 : vector<1x128xf32> to vector<24x128xf32>
      %16 = arith.addf %13, %15 : vector<24x128xf32>
      %cst_15 = arith.constant 5.000000e-01 : f32
      %17 = vector.broadcast %cst_15 : f32 to vector<24x128xf32>
      %18 = arith.mulf %17, %16 : vector<24x128xf32>
      %cst_16 = arith.constant 1.41421354 : f32
      %19 = vector.broadcast %cst_16 : f32 to vector<24x128xf32>
      %20 = arith.divf %16, %19 : vector<24x128xf32>
      %21 = math.erf %20 : vector<24x128xf32>
      %cst_17 = arith.constant 1.000000e+00 : f32
      %22 = vector.broadcast %cst_17 : f32 to vector<24x128xf32>
      %23 = arith.addf %22, %21 : vector<24x128xf32>
      %24 = arith.mulf %18, %23 : vector<24x128xf32>
      %cst_18 = arith.constant dense<0.000000e+00> : vector<24xf32>
      %25 = vector.multi_reduction <add>, %24, %cst_18 [1] : vector<24x128xf32> to vector<24xf32>
      %26 = vector.shape_cast %25 : vector<24xf32> to vector<24x1xf32>
      %cst_19 = arith.constant 1.280000e+02 : f32
      %27 = vector.broadcast %cst_19 : f32 to vector<24x1xf32>
      %28 = arith.divf %26, %27 : vector<24x1xf32>
      %29 = vector.broadcast %28 : vector<24x1xf32> to vector<24x128xf32>
      %30 = arith.subf %24, %29 : vector<24x128xf32>
      %31 = arith.mulf %30, %30 : vector<24x128xf32>
      %cst_20 = arith.constant dense<0.000000e+00> : vector<24xf32>
      %32 = vector.multi_reduction <add>, %31, %cst_20 [1] : vector<24x128xf32> to vector<24xf32>
      %33 = vector.shape_cast %32 : vector<24xf32> to vector<24x1xf32>
      %cst_21 = arith.constant 1.280000e+02 : f32
      %34 = vector.broadcast %cst_21 : f32 to vector<24x1xf32>
      %35 = arith.divf %33, %34 : vector<24x1xf32>
      %36 = vector.broadcast %28 : vector<24x1xf32> to vector<24x128xf32>
      %37 = arith.subf %24, %36 : vector<24x128xf32>
      %cst_22 = arith.constant 9.99999996E-13 : f32
      %38 = vector.broadcast %cst_22 : f32 to vector<24x1xf32>
      %39 = arith.addf %35, %38 : vector<24x1xf32>
      %40 = math.rsqrt %39 : vector<24x1xf32>
      %41 = vector.broadcast %40 : vector<24x1xf32> to vector<24x128xf32>
      %42 = arith.mulf %37, %41 : vector<24x128xf32>
      %c0_23 = arith.constant 0 : index
      %c0_24 = arith.constant 0 : index
      %43 = vector.load %arg5[%c0_23, %c0_24] : memref<1x128xf32, #tpu.memory_space<vmem>>, vector<1x128xf32>
      %44 = vector.broadcast %43 : vector<1x128xf32> to vector<24x128xf32>
      %45 = arith.mulf %42, %44 : vector<24x128xf32>
      %c0_25 = arith.constant 0 : index
      %c0_26 = arith.constant 0 : index
      %46 = vector.load %arg6[%c0_25, %c0_26] : memref<1x128xf32, #tpu.memory_space<vmem>>, vector<1x128xf32>
      %47 = vector.broadcast %46 : vector<1x128xf32> to vector<24x128xf32>
      %48 = arith.addf %45, %47 : vector<24x128xf32>
      %49 = arith.truncf %48 : vector<24x128xf32> to vector<24x128xbf16>
      %c0_27 = arith.constant 0 : index
      %c0_28 = arith.constant 0 : index
      %50 = vector.load %arg10[%c0_27, %c0_28] : memref<24x128xbf16, #tpu.memory_space<vmem>>, vector<24x128xbf16>
      tpu.vector_store %arg10[%c0_27, %c0_28], %49 {strides = array<i32>} : memref<24x128xbf16, #tpu.memory_space<vmem>>, vector<24x128xbf16>,
    } else {
    }
    %c0 = arith.constant 0 : index
    %c0_1 = arith.constant 0 : index
    %3 = vector.load %arg10[%c0, %c0_1] : memref<24x128xbf16, #tpu.memory_space<vmem>>, vector<24x128xbf16>
    %c0_2 = arith.constant 0 : index
    %c0_3 = arith.constant 0 : index
    %4 = vector.load %arg7[%c0_2, %c0_3] : memref<128x384xbf16, #tpu.memory_space<vmem>>, vector<128x384xbf16>
    %cst = arith.constant dense<0.000000e+00> : vector<24x384xf32>
    %5 = tpu.matmul %3, %4, %cst {dimension_numbers = #tpu.dot_dimension_numbers<[1], [0], [0], [1], [0, 0, 1, 1], [], []>} : vector<24x128xbf16>, vector<128x384xbf16>, vector<24x384xf32> -> vector<24x384xf32>
    %c0_4 = arith.constant 0 : index
    %c0_5 = arith.constant 0 : index
    %6 = vector.load %arg8[%c0_4, %c0_5] : memref<1x384xf32, #tpu.memory_space<vmem>>, vector<1x384xf32>
    %7 = vector.broadcast %6 : vector<1x384xf32> to vector<24x384xf32>
    %8 = arith.addf %5, %7 : vector<24x384xf32>
    %9 = arith.truncf %8 : vector<24x384xf32> to vector<24x384xbf16>
    %c0_6 = arith.constant 0 : index
    %c0_7 = arith.constant 0 : index
    %10 = vector.load %arg9[%c0_6, %c0_7] : memref<24x384xbf16, #tpu.memory_space<vmem>>, vector<24x384xbf16>
    tpu.vector_store %arg9[%c0_6, %c0_7], %9 {strides = array<i32>} : memref<24x384xbf16, #tpu.memory_space<vmem>>, vector<24x384xbf16>,
    return
  }
  func.func @transform_0(%arg0: i32, %arg1: i32) -> (i32, i32) {
    %c0_i32 = arith.constant 0 : i32
    %c0_i32_0 = arith.constant 0 : i32
    return %arg0, %c0_i32 : i32, i32
  }
  func.func @transform_1(%arg0: i32, %arg1: i32) -> (i32, i32) {
    %c0_i32 = arith.constant 0 : i32
    %c0_i32_0 = arith.constant 0 : i32
    %c0_i32_1 = arith.constant 0 : i32
    return %c0_i32, %c0_i32_0 : i32, i32
  }
  func.func @transform_2(%arg0: i32, %arg1: i32) -> (i32, i32) {
    %c0_i32 = arith.constant 0 : i32
    %c0_i32_0 = arith.constant 0 : i32
    %c0_i32_1 = arith.constant 0 : i32
    return %c0_i32, %c0_i32_0 : i32, i32
  }
  func.func @transform_3(%arg0: i32, %arg1: i32) -> (i32, i32) {
    %c0_i32 = arith.constant 0 : i32
    %c0_i32_0 = arith.constant 0 : i32
    %c0_i32_1 = arith.constant 0 : i32
    return %c0_i32, %c0_i32_0 : i32, i32
  }
  func.func @transform_4(%arg0: i32, %arg1: i32) -> (i32, i32) {
    %c0_i32 = arith.constant 0 : i32
    %c0_i32_0 = arith.constant 0 : i32
    %c0_i32_1 = arith.constant 0 : i32
    return %c0_i32, %c0_i32_0 : i32, i32
  }
  func.func @transform_5(%arg0: i32, %arg1: i32) -> (i32, i32) {
    %c0_i32 = arith.constant 0 : i32
    %c0_i32_0 = arith.constant 0 : i32
    return %c0_i32, %arg1 : i32, i32
  }
  func.func @transform_6(%arg0: i32, %arg1: i32) -> (i32, i32) {
    %c0_i32 = arith.constant 0 : i32
    %c0_i32_0 = arith.constant 0 : i32
    return %c0_i32, %arg1 : i32, i32
  }
  func.func @transform_7(%arg0: i32, %arg1: i32) -> (i32, i32) {
    %c0_i32 = arith.constant 0 : i32
    return %arg0, %arg1 : i32, i32
  }
}

</mosaic_0001>

<llo_original>
// kernel: tpu_custom_call.1
$region0: #{tpu_custom_call.1}
  #allocation0 [shape = 'u32[]', space=smem, size = 0x4, offset = 0x4, fixed_abs, tag = 'smem constant byte address 0x4 - core index']
  #allocation1 [shape = 'u32[144,128]{1,0:T(1,128)}', space=vmem, size = 0x12000, scoped, tag = 'internal scratch']
  #allocation2 [shape = 'bf16[24,128]{1,0:T(8,128)(2,1)}', space=vmem, size = 0x1800, scoped, tag = 'scratch operand']
  %s0 = inlined_call_operand.hbm [shape: bf16[24,128], index: 0, kind: input, shape index: {}]
  %s1 = inlined_call_operand.hbm [shape: bf16[128,128], index: 1, kind: input, shape index: {}]
  %s2 = inlined_call_operand.vmem [shape: f32[1,128], index: 2, kind: input, shape index: {}]
  %s3 = inlined_call_operand.vmem [shape: f32[1,128], index: 3, kind: input, shape index: {}]
  %s4 = inlined_call_operand.vmem [shape: f32[1,128], index: 4, kind: input, shape index: {}]
  %s5 = inlined_call_operand.hbm [shape: bf16[128,384], index: 5, kind: input, shape index: {}]
  %s6 = inlined_call_operand.vmem [shape: f32[1,384], index: 6, kind: input, shape index: {}]
  %s7 = inlined_call_operand.hbm [shape: bf16[24,384], index: 7, kind: output, shape index: {}]
  %s8 = sld [smem:[#allocation0]]
  $region54: #{tpu_custom_call.1} parent=0
    _
  %s10 = ssub.s32 1, %s8
  %s11 = scalar_select 0, %s10, %s8
  $region1: #{tpu_custom_call.1} parent=0
    #allocation3 [shape = 'u8[6144]{0}', space=vmem, size = 0x1800, scoped, tag = 'input window, operand 0, single buffered']
    #allocation4 [shape = 's32[1]{0}', space=sflag, size = 0x4, scoped, tag = 'scoped memory for tpu_custom_call.1']
    #allocation5 [shape = 's32[1]{0}', space=sflag, size = 0x4, scoped, tag = 'scoped memory for tpu_custom_call.1']
    #allocation6 [shape = 'u8[32768]{0}', space=vmem, size = 0x8000, scoped, tag = 'input window, operand 1, single buffered']
    #allocation7 [shape = 's32[1]{0}', space=sflag, size = 0x4, scoped, tag = 'scoped memory for tpu_custom_call.1']
    #allocation8 [shape = 'u8[98304]{0}', space=vmem, size = 0x18000, scoped, tag = 'input window, operand 5, single buffered']
    #allocation9 [shape = 'u8[18432]{0}', space=vmem, size = 0x4800, scoped, tag = 'output window, operand 0, single buffered']
    %12 = vsyncpa [#allocation4], 0
    %13 = vsyncpa [#allocation7], 0
    %14 = vsyncpa [#allocation5], 0
    // Predicated region
    $region2: #{tpu_custom_call.1} parent=1 // pred_check
      _
    $region3: #{tpu_custom_call.1} parent=1 // pred_check_branch
      %16 = sbr.rel (0) target = $region5
    $region4: #{tpu_custom_call.1} parent=1 // pred_region
      %s18 = ssub.s32 192, 192
      %19 = vsyncadd [#allocation4], %s18
      %s20 = sshll.u32 [#allocation3], 4
      %s21 = int_to_ptr.vmem [resolvable:$true] %s20
      %26 = dma.hbm_to_vmem [thread:$0]  %s0, 192, %s21, [#allocation4], 64, 64, 4
    $region5: #{tpu_custom_call.1} parent=1 // pred_fallthru
      _
    // Predicated region
    $region6: #{tpu_custom_call.1} parent=1 // pred_check
      _
    $region7: #{tpu_custom_call.1} parent=1 // pred_check_branch
      %28 = sbr.rel (0) target = $region9
    $region8: #{tpu_custom_call.1} parent=1 // pred_region
      %s30 = ssub.s32 1024, 1024
      %31 = vsyncadd [#allocation7], %s30
      %s32 = sshll.u32 [#allocation6], 4
      %s33 = int_to_ptr.vmem [resolvable:$true] %s32
      %38 = dma.hbm_to_vmem [thread:$0]  %s1, 1024, %s33, [#allocation7], 64, 64, 4
    $region9: #{tpu_custom_call.1} parent=1 // pred_fallthru
      _
    // Predicated region
    $region10: #{tpu_custom_call.1} parent=1 // pred_check
      _
    $region11: #{tpu_custom_call.1} parent=1 // pred_check_branch
      %40 = sbr.rel (0) target = $region13
    $region12: #{tpu_custom_call.1} parent=1 // pred_region
      _
    $region13: #{tpu_custom_call.1} parent=1 // pred_fallthru
      _
    // Predicated region
    $region14: #{tpu_custom_call.1} parent=1 // pred_check
      _
    $region15: #{tpu_custom_call.1} parent=1 // pred_check_branch
      %42 = sbr.rel (0) target = $region17
    $region16: #{tpu_custom_call.1} parent=1 // pred_region
      _
    $region17: #{tpu_custom_call.1} parent=1 // pred_fallthru
      _
    // Predicated region
    $region18: #{tpu_custom_call.1} parent=1 // pred_check
      _
    $region19: #{tpu_custom_call.1} parent=1 // pred_check_branch
      %44 = sbr.rel (0) target = $region21
    $region20: #{tpu_custom_call.1} parent=1 // pred_region
      _
    $region21: #{tpu_custom_call.1} parent=1 // pred_fallthru
      _
    // Predicated region
    $region22: #{tpu_custom_call.1} parent=1 // pred_check
      _
    $region23: #{tpu_custom_call.1} parent=1 // pred_check_branch
      %46 = sbr.rel (0) target = $region25
    $region24: #{tpu_custom_call.1} parent=1 // pred_region
      %s48 = ssub.s32 3072, 3072
      %49 = vsyncadd [#allocation7], %s48
      %s50 = sshll.u32 [#allocation8], 4
      %s51 = int_to_ptr.vmem [resolvable:$true] %s50
      %56 = dma.hbm_to_vmem [thread:$0]  %s5, 3072, %s51, [#allocation7], 192, 192, 12
    $region25: #{tpu_custom_call.1} parent=1 // pred_fallthru
      _
    // Predicated region
    $region26: #{tpu_custom_call.1} parent=1 // pred_check
      _
    $region27: #{tpu_custom_call.1} parent=1 // pred_check_branch
      %58 = sbr.rel (0) target = $region29
    $region28: #{tpu_custom_call.1} parent=1 // pred_region
      _
    $region29: #{tpu_custom_call.1} parent=1 // pred_fallthru
      _
    // Predicated region
    $region30: #{tpu_custom_call.1} parent=1 // pred_check
      _
    $region31: #{tpu_custom_call.1} parent=1 // pred_check_branch
      %60 = sbr.rel (0) target = $region33
    $region32: #{tpu_custom_call.1} parent=1 // pred_region
      %61 = dma.done [#allocation4], 192
    $region33: #{tpu_custom_call.1} parent=1 // pred_fallthru
      _
    // Predicated region
    $region34: #{tpu_custom_call.1} parent=1 // pred_check
      _
    $region35: #{tpu_custom_call.1} parent=1 // pred_check_branch
      %63 = sbr.rel (0) target = $region37
    $region36: #{tpu_custom_call.1} parent=1 // pred_region
      %64 = dma.done [#allocation7], 1024
    $region37: #{tpu_custom_call.1} parent=1 // pred_fallthru
      _
    // Predicated region
    $region38: #{tpu_custom_call.1} parent=1 // pred_check
      _
    $region39: #{tpu_custom_call.1} parent=1 // pred_check_branch
      %66 = sbr.rel (0) target = $region41
    $region40: #{tpu_custom_call.1} parent=1 // pred_region
      %67 = dma.done [#allocation7], 3072
    $region41: #{tpu_custom_call.1} parent=1 // pred_fallthru
      _
    %p69 = scmp.eq.s32.totalorder 0, 0
    // Predicated region
    $region42: #{tpu_custom_call.1} parent=1 // pred_check
      %p70 = pneg %p69
    $region43: #{tpu_custom_call.1} parent=1 // pred_check_branch
      %72 = sbr.rel (%p70) target = $region45
    $region44: #{tpu_custom_call.1} parent=1 // pred_region
      %v73 = vld [vmem:[#allocation3] sm:$0xf]
      %v74 = vld [vmem:[#allocation3 + $0x4] sm:$0xf]
      %v75 = vld [vmem:[#allocation3 + $0x8] sm:$0xf]
      %v76 = vld [vmem:[#allocation6] sm:$0xf]
      %v77 = vld [vmem:[#allocation6 + $0x4] sm:$0xf]
      %v78 = vld [vmem:[#allocation6 + $0x8] sm:$0xf]
      %v79 = vld [vmem:[#allocation6 + $0xc] sm:$0xf]
      %v80 = vld [vmem:[#allocation6 + $0x10] sm:$0xf]
      %v81 = vld [vmem:[#allocation6 + $0x14] sm:$0xf]
      %v82 = vld [vmem:[#allocation6 + $0x18] sm:$0xf]
      %v83 = vld [vmem:[#allocation6 + $0x1c] sm:$0xf]
      %v84 = vld [vmem:[#allocation6 + $0x20] sm:$0xf]
      %v85 = vld [vmem:[#allocation6 + $0x24] sm:$0xf]
      %v86 = vld [vmem:[#allocation6 + $0x28] sm:$0xf]
      %v87 = vld [vmem:[#allocation6 + $0x2c] sm:$0xf]
      %v88 = vld [vmem:[#allocation6 + $0x30] sm:$0xf]
      %v89 = vld [vmem:[#allocation6 + $0x34] sm:$0xf]
      %v90 = vld [vmem:[#allocation6 + $0x38] sm:$0xf]
      %v91 = vld [vmem:[#allocation6 + $0x3c] sm:$0xf]
      %v92 = vld [vmem:[%s2] sm:$0x1]
      %v94 = vlaneseq
      %v95 = vshrl.u32 %v94, 7
      %v96 = vsub.s32 0, %v95
      %v97 = vrot.slane %v92, %v96
      %v102 = vunpack.c.l.b16 %v73
      %v103 = vunpack.c.l.b16 %v74
      %v104 = vunpack.c.l.b16 %v75
      %v105 = vpack.c.b16 %v103, %v102
      %v106 = vpack.c.b16 %v104, %v104
      %v125 = vunpack.c.l.b16 %v76
      %v126 = vunpack.c.l.b16 %v77
      %v127 = vunpack.c.l.b16 %v78
      %v128 = vunpack.c.l.b16 %v79
      %v129 = vunpack.c.l.b16 %v80
      %v130 = vunpack.c.l.b16 %v81
      %v131 = vunpack.c.l.b16 %v82
      %v132 = vunpack.c.l.b16 %v83
      %v133 = vunpack.c.l.b16 %v84
      %v134 = vunpack.c.l.b16 %v85
      %v135 = vunpack.c.l.b16 %v86
      %v136 = vunpack.c.l.b16 %v87
      %v137 = vunpack.c.l.b16 %v88
      %v138 = vunpack.c.l.b16 %v89
      %v139 = vunpack.c.l.b16 %v90
      %v140 = vunpack.c.l.b16 %v91
      %v141 = vpack.c.b16 %v126, %v125
      %v142 = vpack.c.b16 %v128, %v127
      %v143 = vpack.c.b16 %v130, %v129
      %v144 = vpack.c.b16 %v132, %v131
      %v145 = vpack.c.b16 %v134, %v133
      %v146 = vpack.c.b16 %v136, %v135
      %v147 = vpack.c.b16 %v138, %v137
      %v148 = vpack.c.b16 %v140, %v139
      %157 = vmatprep.subr.bf16.mxu0 0
      %158 = vmatpush1.bf16.msra.mxu0 %v148
      %159 = vmatprep.subr.bf16.mxu0 0
      %160 = vmatpush1.bf16.msra.mxu0 %v147
      %161 = vmatprep.subr.bf16.mxu0 0
      %162 = vmatpush1.bf16.msra.mxu0 %v146
      %163 = vmatprep.subr.bf16.mxu0 0
      %164 = vmatpush1.bf16.msra.mxu0 %v145
      %165 = vmatprep.subr.bf16.mxu0 0
      %166 = vmatpush1.bf16.msra.mxu0 %v144
      %167 = vmatprep.subr.bf16.mxu0 0
      %168 = vmatpush1.bf16.msra.mxu0 %v143
      %169 = vmatprep.subr.bf16.mxu0 0
      %170 = vmatpush1.bf16.msra.mxu0 %v142
      %171 = vmatprep.subr.bf16.mxu0 0
      %172 = vmatpush1.bf16.msra.mxu0 %v141
      %173 = vmatprep.subr.bf16.mxu0 0
      %174 = vmatpush2.bf16.msra.mxu0 0
      %175 = vmatprep.subr.bf16.mxu0 0
      %176 = vmatpush2.bf16.msra.mxu0 0
      %177 = vmatprep.subr.bf16.mxu0 0
      %178 = vmatpush2.bf16.msra.mxu0 0
      %179 = vmatprep.subr.bf16.mxu0 0
      %180 = vmatpush2.bf16.msra.mxu0 0
      %181 = vmatprep.subr.bf16.mxu0 0
      %182 = vmatpush2.bf16.msra.mxu0 0
      %183 = vmatprep.subr.bf16.mxu0 0
      %184 = vmatpush2.bf16.msra.mxu0 0
      %185 = vmatprep.subr.bf16.mxu0 0
      %186 = vmatpush2.bf16.msra.mxu0 0
      %187 = vmatprep.subr.bf16.mxu0 0
      %188 = vmatpush2.bf16.msra.mxu0 0
      %189 = vmatprep.mubr.bf16.mxu0 0
      %190 = vmatmul.mubr.bf16.gmra.mxu0 %v105
      %v191 = vpop.f32.mrf.mxu0
      %v192 = vadd.f32 %v97, %v191
      %v193 = vpop.f32.mrf.mxu0
      %v194 = vpop.f32.mrf.mxu0
      %v195 = vadd.f32 %v97, %v194
      %v196 = vpop.f32.mrf.mxu0
      %197 = vmatprep.mubr.bf16.mxu0 0
      %198 = vmatmul.mubr.bf16.gmra.mxu0 %v106
      %v199 = vpop.f32.mrf.mxu0
      %v200 = vadd.f32 %v97, %v199
      %v201 = vpop.f32.mrf.mxu0
      %v202 = vpop.f32.mrf.mxu0
      %v203 = vpop.f32.mrf.mxu0
      %204 = vdwg.mxu0
      %v205 = vmul.f32 %v192, 0.5
      %v206 = vmul.f32 %v195, 0.5
      %v207 = vmul.f32 %v200, 0.5
      %v208 = vrcp.pop 1.4142135
      %v209 = vmul.f32 %v192, %v208
      %v210 = vmul.f32 %v195, %v208
      %v211 = vmul.f32 %v200, %v208
      %v212 = verf.f32.pop %v209
      %v213 = verf.f32.pop %v210
      %v214 = verf.f32.pop %v211
      %v215 = vadd.f32 %v212, 1.0
      %v216 = vadd.f32 %v213, 1.0
      %v217 = vadd.f32 %v214, 1.0
      %v218 = vmul.f32 %v205, %v215
      %v219 = vmul.f32 %v206, %v216
      %v220 = vmul.f32 %v207, %v217
      %221 = vadd.xlane.f32.xlu0 %v218
      %v222 = vpop.xlane.xlu0 %221
      %223 = vadd.xlane.f32.xlu0 %v219
      %v224 = vpop.xlane.xlu0 %223
      %225 = vadd.xlane.f32.xlu0 %v220
      %v226 = vpop.xlane.xlu0 %225
      %v227 = vrcp.pop 128.0
      %v228 = vmul.f32 %v222, %v227
      %v229 = vmul.f32 %v224, %v227
      %v230 = vmul.f32 %v226, %v227
      %v231 = vsub.f32 %v218, %v228
      %v232 = vsub.f32 %v219, %v229
      %v233 = vsub.f32 %v220, %v230
      %v234 = vmul.f32 %v231, %v231
      %v235 = vmul.f32 %v232, %v232
      %v236 = vmul.f32 %v233, %v233
      %237 = vadd.xlane.f32.xlu0 %v234
      %v238 = vpop.xlane.xlu0 %237
      %239 = vadd.xlane.f32.xlu0 %v235
      %v240 = vpop.xlane.xlu0 %239
      %241 = vadd.xlane.f32.xlu0 %v236
      %v242 = vpop.xlane.xlu0 %241
      %v243 = vmul.f32 %v238, %v227
      %v244 = vmul.f32 %v240, %v227
      %v245 = vmul.f32 %v242, %v227
      %v246 = vadd.f32 %v243, 1e-12
      %v247 = vadd.f32 %v244, 1e-12
      %v248 = vadd.f32 %v245, 1e-12
      %v249 = vrsqrt.pop %v246
      %v250 = vrsqrt.pop %v247
      %v251 = vrsqrt.pop %v248
      %v252 = vmul.f32 %v231, %v249
      %v253 = vmul.f32 %v232, %v250
      %v254 = vmul.f32 %v233, %v251
      %v255 = vld [vmem:[%s3] sm:$0x1]
      %v257 = vlaneseq
      %v258 = vshrl.u32 %v257, 7
      %v259 = vsub.s32 0, %v258
      %v260 = vrot.slane %v255, %v259
      %v262 = vmul.f32 %v252, %v260
      %v263 = vmul.f32 %v253, %v260
      %v264 = vmul.f32 %v254, %v260
      %v265 = vld [vmem:[%s4] sm:$0x1]
      %v267 = vlaneseq
      %v268 = vshrl.u32 %v267, 7
      %v269 = vsub.s32 0, %v268
      %v270 = vrot.slane %v265, %v269
      %v272 = vadd.f32 %v262, %v270
      %v273 = vadd.f32 %v263, %v270
      %v274 = vadd.f32 %v264, %v270
      %v275 = vpack.c.bf16 %v273, %v272
      %v276 = vpack.c.bf16 %v274, %v274
      %v279 = vunpack.c.l.b16 %v275
      %v280 = vunpack.c.h.b16 %v275
      %v281 = vunpack.c.l.b16 %v276
      %v282 = vpack.c.b16 %v279, %v279
      %v283 = vpack.c.b16 %v280, %v280
      %v284 = vpack.c.b16 %v281, %v281
      %288 = vst [vmem:[#allocation2] sm:$0xf] %v282
      %289 = vst [vmem:[#allocation2 + $0x4] sm:$0xf] %v283
      %290 = vst [vmem:[#allocation2 + $0x8] sm:$0xf] %v284
    $region45: #{tpu_custom_call.1} parent=1 // pred_fallthru
      _
    %v291 = vld [vmem:[#allocation2] sm:$0xf]
    %v292 = vld [vmem:[#allocation2 + $0x4] sm:$0xf]
    %v293 = vld [vmem:[#allocation2 + $0x8] sm:$0xf]
    %v294 = vld [vmem:[#allocation8] sm:$0xff]
    %v295 = vld [vmem:[#allocation8 + $0x8] sm:$0xf]
    %v296 = vld [vmem:[#allocation8 + $0xc] sm:$0xff]
    %v297 = vld [vmem:[#allocation8 + $0x14] sm:$0xf]
    %v298 = vld [vmem:[#allocation8 + $0x18] sm:$0xff]
    %v299 = vld [vmem:[#allocation8 + $0x20] sm:$0xf]
    %v300 = vld [vmem:[#allocation8 + $0x24] sm:$0xff]
    %v301 = vld [vmem:[#allocation8 + $0x2c] sm:$0xf]
    %v302 = vld [vmem:[#allocation8 + $0x30] sm:$0xff]
    %v303 = vld [vmem:[#allocation8 + $0x38] sm:$0xf]
    %v304 = vld [vmem:[#allocation8 + $0x3c] sm:$0xff]
    %v305 = vld [vmem:[#allocation8 + $0x44] sm:$0xf]
    %v306 = vld [vmem:[#allocation8 + $0x48] sm:$0xff]
    %v307 = vld [vmem:[#allocation8 + $0x50] sm:$0xf]
    %v308 = vld [vmem:[#allocation8 + $0x54] sm:$0xff]
    %v309 = vld [vmem:[#allocation8 + $0x5c] sm:$0xf]
    %v310 = vld [vmem:[#allocation8 + $0x60] sm:$0xff]
    %v311 = vld [vmem:[#allocation8 + $0x68] sm:$0xf]
    %v312 = vld [vmem:[#allocation8 + $0x6c] sm:$0xff]
    %v313 = vld [vmem:[#allocation8 + $0x74] sm:$0xf]
    %v314 = vld [vmem:[#allocation8 + $0x78] sm:$0xff]
    %v315 = vld [vmem:[#allocation8 + $0x80] sm:$0xf]
    %v316 = vld [vmem:[#allocation8 + $0x84] sm:$0xff]
    %v317 = vld [vmem:[#allocation8 + $0x8c] sm:$0xf]
    %v318 = vld [vmem:[#allocation8 + $0x90] sm:$0xff]
    %v319 = vld [vmem:[#allocation8 + $0x98] sm:$0xf]
    %v320 = vld [vmem:[#allocation8 + $0x9c] sm:$0xff]
    %v321 = vld [vmem:[#allocation8 + $0xa4] sm:$0xf]
    %v322 = vld [vmem:[#allocation8 + $0xa8] sm:$0xff]
    %v323 = vld [vmem:[#allocation8 + $0xb0] sm:$0xf]
    %v324 = vld [vmem:[#allocation8 + $0xb4] sm:$0xff]
    %v325 = vld [vmem:[#allocation8 + $0xbc] sm:$0xf]
    %v326 = vld [vmem:[%s6] sm:$0x7]
    %v328 = vlaneseq
    %v329 = vshrl.u32 %v328, 7
    %v330 = vsub.s32 0, %v329
    %v331 = vrot.slane %v326, %v330
    %v332 = vlaneseq
    %v333 = vshrl.u32 %v332, 7
    %v334 = vsub.s32 1, %v333
    %v335 = vrot.slane %v326, %v334
    %v336 = vlaneseq
    %v337 = vshrl.u32 %v336, 7
    %v338 = vsub.s32 2, %v337
    %v339 = vrot.slane %v326, %v338
    %v346 = vunpack.c.l.b16 %v291
    %v347 = vunpack.c.l.b16 %v292
    %v348 = vunpack.c.l.b16 %v293
    %v349 = vpack.c.b16 %v347, %v346
    %v350 = vpack.c.b16 %v348, %v348
    %v385 = vunpack.c.l.b16 %v294
    %v386 = vunpack.c.h.b16 %v294
    %v387 = vunpack.c.l.b16 %v295
    %v388 = vunpack.c.l.b16 %v296
    %v389 = vunpack.c.h.b16 %v296
    %v390 = vunpack.c.l.b16 %v297
    %v391 = vunpack.c.l.b16 %v298
    %v392 = vunpack.c.h.b16 %v298
    %v393 = vunpack.c.l.b16 %v299
    %v394 = vunpack.c.l.b16 %v300
    %v395 = vunpack.c.h.b16 %v300
    %v396 = vunpack.c.l.b16 %v301
    %v397 = vunpack.c.l.b16 %v302
    %v398 = vunpack.c.h.b16 %v302
    %v399 = vunpack.c.l.b16 %v303
    %v400 = vunpack.c.l.b16 %v304
    %v401 = vunpack.c.h.b16 %v304
    %v402 = vunpack.c.l.b16 %v305
    %v403 = vunpack.c.l.b16 %v306
    %v404 = vunpack.c.h.b16 %v306
    %v405 = vunpack.c.l.b16 %v307
    %v406 = vunpack.c.l.b16 %v308
    %v407 = vunpack.c.h.b16 %v308
    %v408 = vunpack.c.l.b16 %v309
    %v409 = vunpack.c.l.b16 %v310
    %v410 = vunpack.c.h.b16 %v310
    %v411 = vunpack.c.l.b16 %v311
    %v412 = vunpack.c.l.b16 %v312
    %v413 = vunpack.c.h.b16 %v312
    %v414 = vunpack.c.l.b16 %v313
    %v415 = vunpack.c.l.b16 %v314
    %v416 = vunpack.c.h.b16 %v314
    %v417 = vunpack.c.l.b16 %v315
    %v418 = vunpack.c.l.b16 %v316
    %v419 = vunpack.c.h.b16 %v316
    %v420 = vunpack.c.l.b16 %v317
    %v421 = vunpack.c.l.b16 %v318
    %v422 = vunpack.c.h.b16 %v318
    %v423 = vunpack.c.l.b16 %v319
    %v424 = vunpack.c.l.b16 %v320
    %v425 = vunpack.c.h.b16 %v320
    %v426 = vunpack.c.l.b16 %v321
    %v427 = vunpack.c.l.b16 %v322
    %v428 = vunpack.c.h.b16 %v322
    %v429 = vunpack.c.l.b16 %v323
    %v430 = vunpack.c.l.b16 %v324
    %v431 = vunpack.c.h.b16 %v324
    %v432 = vunpack.c.l.b16 %v325
    %v433 = vpack.c.b16 %v388, %v385
    %v434 = vpack.c.b16 %v389, %v386
    %v435 = vpack.c.b16 %v390, %v387
    %v436 = vpack.c.b16 %v394, %v391
    %v437 = vpack.c.b16 %v395, %v392
    %v438 = vpack.c.b16 %v396, %v393
    %v439 = vpack.c.b16 %v400, %v397
    %v440 = vpack.c.b16 %v401, %v398
    %v441 = vpack.c.b16 %v402, %v399
    %v442 = vpack.c.b16 %v406, %v403
    %v443 = vpack.c.b16 %v407, %v404
    %v444 = vpack.c.b16 %v408, %v405
    %v445 = vpack.c.b16 %v412, %v409
    %v446 = vpack.c.b16 %v413, %v410
    %v447 = vpack.c.b16 %v414, %v411
    %v448 = vpack.c.b16 %v418, %v415
    %v449 = vpack.c.b16 %v419, %v416
    %v450 = vpack.c.b16 %v420, %v417
    %v451 = vpack.c.b16 %v424, %v421
    %v452 = vpack.c.b16 %v425, %v422
    %v453 = vpack.c.b16 %v426, %v423
    %v454 = vpack.c.b16 %v430, %v427
    %v455 = vpack.c.b16 %v431, %v428
    %v456 = vpack.c.b16 %v432, %v429
    %481 = vmatprep.subr.bf16.mxu0 %v455
    %482 = vmatpush1.bf16.msra.mxu0 %v454
    %483 = vmatprep.subr.bf16.mxu0 %v452
    %484 = vmatpush1.bf16.msra.mxu0 %v451
    %485 = vmatprep.subr.bf16.mxu0 %v449
    %486 = vmatpush1.bf16.msra.mxu0 %v448
    %487 = vmatprep.subr.bf16.mxu0 %v446
    %488 = vmatpush1.bf16.msra.mxu0 %v445
    %489 = vmatprep.subr.bf16.mxu0 %v443
    %490 = vmatpush1.bf16.msra.mxu0 %v442
    %491 = vmatprep.subr.bf16.mxu0 %v440
    %492 = vmatpush1.bf16.msra.mxu0 %v439
    %493 = vmatprep.subr.bf16.mxu0 %v437
    %494 = vmatpush1.bf16.msra.mxu0 %v436
    %495 = vmatprep.subr.bf16.mxu0 %v434
    %496 = vmatpush1.bf16.msra.mxu0 %v433
    %497 = vmatprep.subr.bf16.mxu0 0
    %498 = vmatpush2.bf16.msra.mxu0 0
    %499 = vmatprep.subr.bf16.mxu0 0
    %500 = vmatpush2.bf16.msra.mxu0 0
    %501 = vmatprep.subr.bf16.mxu0 0
    %502 = vmatpush2.bf16.msra.mxu0 0
    %503 = vmatprep.subr.bf16.mxu0 0
    %504 = vmatpush2.bf16.msra.mxu0 0
    %505 = vmatprep.subr.bf16.mxu0 0
    %506 = vmatpush2.bf16.msra.mxu0 0
    %507 = vmatprep.subr.bf16.mxu0 0
    %508 = vmatpush2.bf16.msra.mxu0 0
    %509 = vmatprep.subr.bf16.mxu0 0
    %510 = vmatpush2.bf16.msra.mxu0 0
    %511 = vmatprep.subr.bf16.mxu0 0
    %512 = vmatpush2.bf16.msra.mxu0 0
    %513 = vmatprep.mubr.bf16.mxu0 0
    %514 = vmatmul.mubr.bf16.gmra.mxu0 %v349
    %v515 = vpop.f32.mrf.mxu0
    %v516 = vadd.f32 %v331, %v515
    %v517 = vpop.f32.mrf.mxu0
    %v518 = vadd.f32 %v335, %v517
    %v519 = vpop.f32.mrf.mxu0
    %v520 = vadd.f32 %v331, %v519
    %v521 = vpop.f32.mrf.mxu0
    %v522 = vadd.f32 %v335, %v521
    %523 = vmatprep.mubr.bf16.mxu0 0
    %524 = vmatmul.mubr.bf16.gmra.mxu0 %v350
    %v525 = vpop.f32.mrf.mxu0
    %v526 = vadd.f32 %v331, %v525
    %v527 = vpop.f32.mrf.mxu0
    %v528 = vadd.f32 %v335, %v527
    %v529 = vpop.f32.mrf.mxu0
    %v530 = vpop.f32.mrf.mxu0
    %531 = vdwg.mxu0
    %532 = vmatprep.subr.bf16.mxu0 0
    %533 = vmatpush1.bf16.msra.mxu0 %v456
    %534 = vmatprep.subr.bf16.mxu0 0
    %535 = vmatpush1.bf16.msra.mxu0 %v453
    %536 = vmatprep.subr.bf16.mxu0 0
    %537 = vmatpush1.bf16.msra.mxu0 %v450
    %538 = vmatprep.subr.bf16.mxu0 0
    %539 = vmatpush1.bf16.msra.mxu0 %v447
    %540 = vmatprep.subr.bf16.mxu0 0
    %541 = vmatpush1.bf16.msra.mxu0 %v444
    %542 = vmatprep.subr.bf16.mxu0 0
    %543 = vmatpush1.bf16.msra.mxu0 %v441
    %544 = vmatprep.subr.bf16.mxu0 0
    %545 = vmatpush1.bf16.msra.mxu0 %v438
    %546 = vmatprep.subr.bf16.mxu0 0
    %547 = vmatpush1.bf16.msra.mxu0 %v435
    %548 = vmatprep.subr.bf16.mxu0 0
    %549 = vmatpush2.bf16.msra.mxu0 0
    %550 = vmatprep.subr.bf16.mxu0 0
    %551 = vmatpush2.bf16.msra.mxu0 0
    %552 = vmatprep.subr.bf16.mxu0 0
    %553 = vmatpush2.bf16.msra.mxu0 0
    %554 = vmatprep.subr.bf16.mxu0 0
    %555 = vmatpush2.bf16.msra.mxu0 0
    %556 = vmatprep.subr.bf16.mxu0 0
    %557 = vmatpush2.bf16.msra.mxu0 0
    %558 = vmatprep.subr.bf16.mxu0 0
    %559 = vmatpush2.bf16.msra.mxu0 0
    %560 = vmatprep.subr.bf16.mxu0 0
    %561 = vmatpush2.bf16.msra.mxu0 0
    %562 = vmatprep.subr.bf16.mxu0 0
    %563 = vmatpush2.bf16.msra.mxu0 0
    %564 = vmatprep.mubr.bf16.mxu0 0
    %565 = vmatmul.mubr.bf16.gmra.mxu0 %v349
    %v566 = vpop.f32.mrf.mxu0
    %v567 = vadd.f32 %v339, %v566
    %v568 = vpop.f32.mrf.mxu0
    %v569 = vpop.f32.mrf.mxu0
    %v570 = vadd.f32 %v339, %v569
    %v571 = vpop.f32.mrf.mxu0
    %572 = vmatprep.mubr.bf16.mxu0 0
    %573 = vmatmul.mubr.bf16.gmra.mxu0 %v350
    %v574 = vpop.f32.mrf.mxu0
    %v575 = vadd.f32 %v339, %v574
    %v576 = vpop.f32.mrf.mxu0
    %v577 = vpop.f32.mrf.mxu0
    %v578 = vpop.f32.mrf.mxu0
    %579 = vdwg.mxu0
    %v580 = vpack.c.bf16 %v520, %v516
    %v581 = vpack.c.bf16 %v522, %v518
    %v582 = vpack.c.bf16 %v570, %v567
    %v583 = vpack.c.bf16 %v526, %v526
    %v584 = vpack.c.bf16 %v528, %v528
    %v585 = vpack.c.bf16 %v575, %v575
    %v592 = vunpack.c.l.b16 %v580
    %v593 = vunpack.c.l.b16 %v581
    %v594 = vunpack.c.l.b16 %v582
    %v595 = vunpack.c.h.b16 %v580
    %v596 = vunpack.c.h.b16 %v581
    %v597 = vunpack.c.h.b16 %v582
    %v598 = vunpack.c.l.b16 %v583
    %v599 = vunpack.c.l.b16 %v584
    %v600 = vunpack.c.l.b16 %v585
    %v601 = vpack.c.b16 %v593, %v592
    %v602 = vpack.c.b16 %v594, %v594
    %v603 = vpack.c.b16 %v596, %v595
    %v604 = vpack.c.b16 %v597, %v597
    %v605 = vpack.c.b16 %v599, %v598
    %v606 = vpack.c.b16 %v600, %v600
    %613 = vst [vmem:[#allocation9] sm:$0xff] %v601
    %614 = vst [vmem:[#allocation9 + $0x8] sm:$0xf] %v602
    %615 = vst [vmem:[#allocation9 + $0xc] sm:$0xff] %v603
    %616 = vst [vmem:[#allocation9 + $0x14] sm:$0xf] %v604
    %617 = vst [vmem:[#allocation9 + $0x18] sm:$0xff] %v605
    %618 = vst [vmem:[#allocation9 + $0x20] sm:$0xf] %v606
    // Predicated region
    $region46: #{tpu_custom_call.1} parent=1 // pred_check
      _
    $region47: #{tpu_custom_call.1} parent=1 // pred_check_branch
      %620 = sbr.rel (0) target = $region49
    $region48: #{tpu_custom_call.1} parent=1 // pred_region
      %s622 = ssub.s32 576, 576
      %623 = vsyncadd [#allocation5], %s622
      %s624 = sshll.u32 [#allocation9], 4
      %s625 = int_to_ptr.vmem [resolvable:$true] %s624
      %630 = dma.vmem_to_hbm [thread:$0]  %s625, 576, %s7, [#allocation5], 192, 192, 12
    $region49: #{tpu_custom_call.1} parent=1 // pred_fallthru
      _
    // Predicated region
    $region50: #{tpu_custom_call.1} parent=1 // pred_check
      _
    $region51: #{tpu_custom_call.1} parent=1 // pred_check_branch
      %632 = sbr.rel (0) target = $region53
    $region52: #{tpu_custom_call.1} parent=1 // pred_region
      %633 = dma.done [#allocation5], 576
    $region53: #{tpu_custom_call.1} parent=1 // pred_fallthru
      _
    %634 = vsyncpa [#allocation4], 1
    %635 = vsyncpa [#allocation7], 1
    %636 = vsyncpa [#allocation5], 1

// kernel: tpu_custom_call.1
$region0: #{tpu_custom_call.1}
  #allocation0 [shape = 'u32[]', space=smem, size = 0x4, offset = 0x4, fixed_abs, tag = 'smem constant byte address 0x4 - core index']
  #allocation1 [shape = 'u32[144,128]{1,0:T(1,128)}', space=vmem, size = 0x12000, scoped, tag = 'internal scratch']
  #allocation2 [shape = 'bf16[24,128]{1,0:T(8,128)(2,1)}', space=vmem, size = 0x1800, scoped, tag = 'scratch operand']
  %s0 = inlined_call_operand.hbm [shape: bf16[24,128], index: 0, kind: input, shape index: {}]
  %s1 = inlined_call_operand.hbm [shape: bf16[128,128], index: 1, kind: input, shape index: {}]
  %s2 = inlined_call_operand.vmem [shape: f32[1,128], index: 2, kind: input, shape index: {}]
  %s3 = inlined_call_operand.vmem [shape: f32[1,128], index: 3, kind: input, shape index: {}]
  %s4 = inlined_call_operand.vmem [shape: f32[1,128], index: 4, kind: input, shape index: {}]
  %s5 = inlined_call_operand.hbm [shape: bf16[128,384], index: 5, kind: input, shape index: {}]
  %s6 = inlined_call_operand.vmem [shape: f32[1,384], index: 6, kind: input, shape index: {}]
  %s7 = inlined_call_operand.hbm [shape: bf16[24,384], index: 7, kind: output, shape index: {}]
  %s8 = sld [smem:[#allocation0]]
  $region54: #{tpu_custom_call.1} parent=0
    _
  %s10 = ssub.s32 1, %s8
  %s11 = scalar_select 0, %s10, %s8
  $region1: #{tpu_custom_call.1} parent=0
    #allocation3 [shape = 'u8[6144]{0}', space=vmem, size = 0x1800, scoped, tag = 'input window, operand 0, single buffered']
    #allocation4 [shape = 's32[1]{0}', space=sflag, size = 0x4, scoped, tag = 'scoped memory for tpu_custom_call.1']
    #allocation5 [shape = 's32[1]{0}', space=sflag, size = 0x4, scoped, tag = 'scoped memory for tpu_custom_call.1']
    #allocation6 [shape = 'u8[32768]{0}', space=vmem, size = 0x8000, scoped, tag = 'input window, operand 1, single buffered']
    #allocation7 [shape = 's32[1]{0}', space=sflag, size = 0x4, scoped, tag = 'scoped memory for tpu_custom_call.1']
    #allocation8 [shape = 'u8[98304]{0}', space=vmem, size = 0x18000, scoped, tag = 'input window, operand 5, single buffered']
    #allocation9 [shape = 'u8[18432]{0}', space=vmem, size = 0x4800, scoped, tag = 'output window, operand 0, single buffered']
    %12 = vsyncpa [#allocation4], 0
    %13 = vsyncpa [#allocation7], 0
    %14 = vsyncpa [#allocation5], 0
    // Predicated region
    $region2: #{tpu_custom_call.1} parent=1 // pred_check
      _
    $region3: #{tpu_custom_call.1} parent=1 // pred_check_branch
      %16 = sbr.rel (0) target = $region5
    $region4: #{tpu_custom_call.1} parent=1 // pred_region
      %s18 = ssub.s32 192, 192
      %19 = vsyncadd [#allocation4], %s18
      %s20 = sshll.u32 [#allocation3], 4
      %s21 = int_to_ptr.vmem [resolvable:$true] %s20
      %26 = dma.hbm_to_vmem [thread:$0]  %s0, 192, %s21, [#allocation4], 64, 64, 4
    $region5: #{tpu_custom_call.1} parent=1 // pred_fallthru
      _
    // Predicated region
    $region6: #{tpu_custom_call.1} parent=1 // pred_check
      _
    $region7: #{tpu_custom_call.1} parent=1 // pred_check_branch
      %28 = sbr.rel (0) target = $region9
    $region8: #{tpu_custom_call.1} parent=1 // pred_region
      %s30 = ssub.s32 1024, 1024
      %31 = vsyncadd [#allocation7], %s30
      %s32 = sshll.u32 [#allocation6], 4
      %s33 = int_to_ptr.vmem [resolvable:$true] %s32
      %38 = dma.hbm_to_vmem [thread:$0]  %s1, 1024, %s33, [#allocation7], 64, 64, 4
    $region9: #{tpu_custom_call.1} parent=1 // pred_fallthru
      _
    // Predicated region
    $region10: #{tpu_custom_call.1} parent=1 // pred_check
      _
    $region11: #{tpu_custom_call.1} parent=1 // pred_check_branch
      %40 = sbr.rel (0) target = $region13
    $region12: #{tpu_custom_call.1} parent=1 // pred_region
      _
    $region13: #{tpu_custom_call.1} parent=1 // pred_fallthru
      _
    // Predicated region
    $region14: #{tpu_custom_call.1} parent=1 // pred_check
      _
    $region15: #{tpu_custom_call.1} parent=1 // pred_check_branch
      %42 = sbr.rel (0) target = $region17
    $region16: #{tpu_custom_call.1} parent=1 // pred_region
      _
    $region17: #{tpu_custom_call.1} parent=1 // pred_fallthru
      _
    // Predicated region
    $region18: #{tpu_custom_call.1} parent=1 // pred_check
      _
    $region19: #{tpu_custom_call.1} parent=1 // pred_check_branch
      %44 = sbr.rel (0) target = $region21
    $region20: #{tpu_custom_call.1} parent=1 // pred_region
      _
    $region21: #{tpu_custom_call.1} parent=1 // pred_fallthru
      _
    // Predicated region
    $region22: #{tpu_custom_call.1} parent=1 // pred_check
      _
    $region23: #{tpu_custom_call.1} parent=1 // pred_check_branch
      %46 = sbr.rel (0) target = $region25
    $region24: #{tpu_custom_call.1} parent=1 // pred_region
      %s48 = ssub.s32 3072, 3072
      %49 = vsyncadd [#allocation7], %s48
      %s50 = sshll.u32 [#allocation8], 4
      %s51 = int_to_ptr.vmem [resolvable:$true] %s50
      %56 = dma.hbm_to_vmem [thread:$0]  %s5, 3072, %s51, [#allocation7], 192, 192, 12
    $region25: #{tpu_custom_call.1} parent=1 // pred_fallthru
      _
    // Predicated region
    $region26: #{tpu_custom_call.1} parent=1 // pred_check
      _
    $region27: #{tpu_custom_call.1} parent=1 // pred_check_branch
      %58 = sbr.rel (0) target = $region29
    $region28: #{tpu_custom_call.1} parent=1 // pred_region
      _
    $region29: #{tpu_custom_call.1} parent=1 // pred_fallthru
      _
    // Predicated region
    $region30: #{tpu_custom_call.1} parent=1 // pred_check
      _
    $region31: #{tpu_custom_call.1} parent=1 // pred_check_branch
      %60 = sbr.rel (0) target = $region33
    $region32: #{tpu_custom_call.1} parent=1 // pred_region
      %61 = dma.done [#allocation4], 192
    $region33: #{tpu_custom_call.1} parent=1 // pred_fallthru
      _
    // Predicated region
    $region34: #{tpu_custom_call.1} parent=1 // pred_check
      _
    $region35: #{tpu_custom_call.1} parent=1 // pred_check_branch
      %63 = sbr.rel (0) target = $region37
    $region36: #{tpu_custom_call.1} parent=1 // pred_region
      %64 = dma.done [#allocation7], 1024
    $region37: #{tpu_custom_call.1} parent=1 // pred_fallthru
      _
    // Predicated region
    $region38: #{tpu_custom_call.1} parent=1 // pred_check
      _
    $region39: #{tpu_custom_call.1} parent=1 // pred_check_branch
      %66 = sbr.rel (0) target = $region41
    $region40: #{tpu_custom_call.1} parent=1 // pred_region
      %67 = dma.done [#allocation7], 3072
    $region41: #{tpu_custom_call.1} parent=1 // pred_fallthru
      _
    %p69 = scmp.eq.s32.totalorder 0, 0
    // Predicated region
    $region42: #{tpu_custom_call.1} parent=1 // pred_check
      %p70 = pneg %p69
    $region43: #{tpu_custom_call.1} parent=1 // pred_check_branch
      %72 = sbr.rel (%p70) target = $region45
    $region44: #{tpu_custom_call.1} parent=1 // pred_region
      %v73 = vld [vmem:[#allocation3] sm:$0xf]
      %v74 = vld [vmem:[#allocation3 + $0x4] sm:$0xf]
      %v75 = vld [vmem:[#allocation3 + $0x8] sm:$0xf]
      %v76 = vld [vmem:[#allocation6] sm:$0xf]
      %v77 = vld [vmem:[#allocation6 + $0x4] sm:$0xf]
      %v78 = vld [vmem:[#allocation6 + $0x8] sm:$0xf]
      %v79 = vld [vmem:[#allocation6 + $0xc] sm:$0xf]
      %v80 = vld [vmem:[#allocation6 + $0x10] sm:$0xf]
      %v81 = vld [vmem:[#allocation6 + $0x14] sm:$0xf]
      %v82 = vld [vmem:[#allocation6 + $0x18] sm:$0xf]
      %v83 = vld [vmem:[#allocation6 + $0x1c] sm:$0xf]
      %v84 = vld [vmem:[#allocation6 + $0x20] sm:$0xf]
      %v85 = vld [vmem:[#allocation6 + $0x24] sm:$0xf]
      %v86 = vld [vmem:[#allocation6 + $0x28] sm:$0xf]
      %v87 = vld [vmem:[#allocation6 + $0x2c] sm:$0xf]
      %v88 = vld [vmem:[#allocation6 + $0x30] sm:$0xf]
      %v89 = vld [vmem:[#allocation6 + $0x34] sm:$0xf]
      %v90 = vld [vmem:[#allocation6 + $0x38] sm:$0xf]
      %v91 = vld [vmem:[#allocation6 + $0x3c] sm:$0xf]
      %v92 = vld [vmem:[%s2] sm:$0x1]
      %v94 = vlaneseq
      %v95 = vshrl.u32 %v94, 7
      %v96 = vsub.s32 0, %v95
      %v97 = vrot.slane %v92, %v96
      %v102 = vunpack.c.l.b16 %v73
      %v103 = vunpack.c.l.b16 %v74
      %v104 = vunpack.c.l.b16 %v75
      %v105 = vpack.c.b16 %v103, %v102
      %v106 = vpack.c.b16 %v104, %v104
      %v125 = vunpack.c.l.b16 %v76
      %v126 = vunpack.c.l.b16 %v77
      %v127 = vunpack.c.l.b16 %v78
      %v128 = vunpack.c.l.b16 %v79
      %v129 = vunpack.c.l.b16 %v80
      %v130 = vunpack.c.l.b16 %v81
      %v131 = vunpack.c.l.b16 %v82
      %v132 = vunpack.c.l.b16 %v83
      %v133 = vunpack.c.l.b16 %v84
      %v134 = vunpack.c.l.b16 %v85
      %v135 = vunpack.c.l.b16 %v86
      %v136 = vunpack.c.l.b16 %v87
      %v137 = vunpack.c.l.b16 %v88
      %v138 = vunpack.c.l.b16 %v89
      %v139 = vunpack.c.l.b16 %v90
      %v140 = vunpack.c.l.b16 %v91
      %v141 = vpack.c.b16 %v126, %v125
      %v142 = vpack.c.b16 %v128, %v127
      %v143 = vpack.c.b16 %v130, %v129
      %v144 = vpack.c.b16 %v132, %v131
      %v145 = vpack.c.b16 %v134, %v133
      %v146 = vpack.c.b16 %v136, %v135
      %v147 = vpack.c.b16 %v138, %v137
      %v148 = vpack.c.b16 %v140, %v139
      %157 = vmatprep.subr.bf16.mxu0 0
      %158 = vmatpush1.bf16.msra.mxu0 %v148
      %159 = vmatprep.subr.bf16.mxu0 0
      %160 = vmatpush1.bf16.msra.mxu0 %v147
      %161 = vmatprep.subr.bf16.mxu0 0
      %162 = vmatpush1.bf16.msra.mxu0 %v146
      %163 = vmatprep.subr.bf16.mxu0 0
      %164 = vmatpush1.bf16.msra.mxu0 %v145
      %165 = vmatprep.subr.bf16.mxu0 0
      %166 = vmatpush1.bf16.msra.mxu0 %v144
      %167 = vmatprep.subr.bf16.mxu0 0
      %168 = vmatpush1.bf16.msra.mxu0 %v143
      %169 = vmatprep.subr.bf16.mxu0 0
      %170 = vmatpush1.bf16.msra.mxu0 %v142
      %171 = vmatprep.subr.bf16.mxu0 0
      %172 = vmatpush1.bf16.msra.mxu0 %v141
      %173 = vmatprep.subr.bf16.mxu0 0
      %174 = vmatpush2.bf16.msra.mxu0 0
      %175 = vmatprep.subr.bf16.mxu0 0
      %176 = vmatpush2.bf16.msra.mxu0 0
      %177 = vmatprep.subr.bf16.mxu0 0
      %178 = vmatpush2.bf16.msra.mxu0 0
      %179 = vmatprep.subr.bf16.mxu0 0
      %180 = vmatpush2.bf16.msra.mxu0 0
      %181 = vmatprep.subr.bf16.mxu0 0
      %182 = vmatpush2.bf16.msra.mxu0 0
      %183 = vmatprep.subr.bf16.mxu0 0
      %184 = vmatpush2.bf16.msra.mxu0 0
      %185 = vmatprep.subr.bf16.mxu0 0
      %186 = vmatpush2.bf16.msra.mxu0 0
      %187 = vmatprep.subr.bf16.mxu0 0
      %188 = vmatpush2.bf16.msra.mxu0 0
      %189 = vmatprep.mubr.bf16.mxu0 0
      %190 = vmatmul.mubr.bf16.gmra.mxu0 %v105
      %v191 = vpop.f32.mrf.mxu0
      %v192 = vadd.f32 %v97, %v191
      %v193 = vpop.f32.mrf.mxu0
      %v194 = vpop.f32.mrf.mxu0
      %v195 = vadd.f32 %v97, %v194
      %v196 = vpop.f32.mrf.mxu0
      %197 = vmatprep.mubr.bf16.mxu0 0
      %198 = vmatmul.mubr.bf16.gmra.mxu0 %v106
      %v199 = vpop.f32.mrf.mxu0
      %v200 = vadd.f32 %v97, %v199
      %v201 = vpop.f32.mrf.mxu0
      %v202 = vpop.f32.mrf.mxu0
      %v203 = vpop.f32.mrf.mxu0
      %204 = vdwg.mxu0
      %v205 = vmul.f32 %v192, 0.5
      %v206 = vmul.f32 %v195, 0.5
      %v207 = vmul.f32 %v200, 0.5
      %v208 = vrcp.pop 1.4142135
      %v209 = vmul.f32 %v192, %v208
      %v210 = vmul.f32 %v195, %v208
      %v211 = vmul.f32 %v200, %v208
      %v212 = verf.f32.pop %v209
      %v213 = verf.f32.pop %v210
      %v214 = verf.f32.pop %v211
      %v215 = vadd.f32 %v212, 1.0
      %v216 = vadd.f32 %v213, 1.0
      %v217 = vadd.f32 %v214, 1.0
      %v218 = vmul.f32 %v205, %v215
      %v219 = vmul.f32 %v206, %v216
      %v220 = vmul.f32 %v207, %v217
      %221 = vadd.xlane.f32.xlu0 %v218
      %v222 = vpop.xlane.xlu0 %221
      %223 = vadd.xlane.f32.xlu0 %v219
      %v224 = vpop.xlane.xlu0 %223
      %225 = vadd.xlane.f32.xlu0 %v220
      %v226 = vpop.xlane.xlu0 %225
      %v227 = vrcp.pop 128.0
      %v228 = vmul.f32 %v222, %v227
      %v229 = vmul.f32 %v224, %v227
      %v230 = vmul.f32 %v226, %v227
      %v231 = vsub.f32 %v218, %v228
      %v232 = vsub.f32 %v219, %v229
      %v233 = vsub.f32 %v220, %v230
      %v234 = vmul.f32 %v231, %v231
      %v235 = vmul.f32 %v232, %v232
      %v236 = vmul.f32 %v233, %v233
      %237 = vadd.xlane.f32.xlu0 %v234
      %v238 = vpop.xlane.xlu0 %237
      %239 = vadd.xlane.f32.xlu0 %v235
      %v240 = vpop.xlane.xlu0 %239
      %241 = vadd.xlane.f32.xlu0 %v236
      %v242 = vpop.xlane.xlu0 %241
      %v243 = vmul.f32 %v238, %v227
      %v244 = vmul.f32 %v240, %v227
      %v245 = vmul.f32 %v242, %v227
      %v246 = vadd.f32 %v243, 1e-12
      %v247 = vadd.f32 %v244, 1e-12
      %v248 = vadd.f32 %v245, 1e-12
      %v249 = vrsqrt.pop %v246
      %v250 = vrsqrt.pop %v247
      %v251 = vrsqrt.pop %v248
      %v252 = vmul.f32 %v231, %v249
      %v253 = vmul.f32 %v232, %v250
      %v254 = vmul.f32 %v233, %v251
      %v255 = vld [vmem:[%s3] sm:$0x1]
      %v257 = vlaneseq
      %v258 = vshrl.u32 %v257, 7
      %v259 = vsub.s32 0, %v258
      %v260 = vrot.slane %v255, %v259
      %v262 = vmul.f32 %v252, %v260
      %v263 = vmul.f32 %v253, %v260
      %v264 = vmul.f32 %v254, %v260
      %v265 = vld [vmem:[%s4] sm:$0x1]
      %v267 = vlaneseq
      %v268 = vshrl.u32 %v267, 7
      %v269 = vsub.s32 0, %v268
      %v270 = vrot.slane %v265, %v269
      %v272 = vadd.f32 %v262, %v270
      %v273 = vadd.f32 %v263, %v270
      %v274 = vadd.f32 %v264, %v270
      %v275 = vpack.c.bf16 %v273, %v272
      %v276 = vpack.c.bf16 %v274, %v274
      %v279 = vunpack.c.l.b16 %v275
      %v280 = vunpack.c.h.b16 %v275
      %v281 = vunpack.c.l.b16 %v276
      %v282 = vpack.c.b16 %v279, %v279
      %v283 = vpack.c.b16 %v280, %v280
      %v284 = vpack.c.b16 %v281, %v281
      %288 = vst [vmem:[#allocation2] sm:$0xf] %v282
      %289 = vst [vmem:[#allocation2 + $0x4] sm:$0xf] %v283
      %290 = vst [vmem:[#allocation2 + $0x8] sm:$0xf] %v284
    $region45: #{tpu_custom_call.1} parent=1 // pred_fallthru
      _
    %v291 = vld [vmem:[#allocation2] sm:$0xf]
    %v292 = vld [vmem:[#allocation2 + $0x4] sm:$0xf]
    %v293 = vld [vmem:[#allocation2 + $0x8] sm:$0xf]
    %v294 = vld [vmem:[#allocation8] sm:$0xff]
    %v295 = vld [vmem:[#allocation8 + $0x8] sm:$0xf]
    %v296 = vld [vmem:[#allocation8 + $0xc] sm:$0xff]
    %v297 = vld [vmem:[#allocation8 + $0x14] sm:$0xf]
    %v298 = vld [vmem:[#allocation8 + $0x18] sm:$0xff]
    %v299 = vld [vmem:[#allocation8 + $0x20] sm:$0xf]
    %v300 = vld [vmem:[#allocation8 + $0x24] sm:$0xff]
    %v301 = vld [vmem:[#allocation8 + $0x2c] sm:$0xf]
    %v302 = vld [vmem:[#allocation8 + $0x30] sm:$0xff]
    %v303 = vld [vmem:[#allocation8 + $0x38] sm:$0xf]
    %v304 = vld [vmem:[#allocation8 + $0x3c] sm:$0xff]
    %v305 = vld [vmem:[#allocation8 + $0x44] sm:$0xf]
    %v306 = vld [vmem:[#allocation8 + $0x48] sm:$0xff]
    %v307 = vld [vmem:[#allocation8 + $0x50] sm:$0xf]
    %v308 = vld [vmem:[#allocation8 + $0x54] sm:$0xff]
    %v309 = vld [vmem:[#allocation8 + $0x5c] sm:$0xf]
    %v310 = vld [vmem:[#allocation8 + $0x60] sm:$0xff]
    %v311 = vld [vmem:[#allocation8 + $0x68] sm:$0xf]
    %v312 = vld [vmem:[#allocation8 + $0x6c] sm:$0xff]
    %v313 = vld [vmem:[#allocation8 + $0x74] sm:$0xf]
    %v314 = vld [vmem:[#allocation8 + $0x78] sm:$0xff]
    %v315 = vld [vmem:[#allocation8 + $0x80] sm:$0xf]
    %v316 = vld [vmem:[#allocation8 + $0x84] sm:$0xff]
    %v317 = vld [vmem:[#allocation8 + $0x8c] sm:$0xf]
    %v318 = vld [vmem:[#allocation8 + $0x90] sm:$0xff]
    %v319 = vld [vmem:[#allocation8 + $0x98] sm:$0xf]
    %v320 = vld [vmem:[#allocation8 + $0x9c] sm:$0xff]
    %v321 = vld [vmem:[#allocation8 + $0xa4] sm:$0xf]
    %v322 = vld [vmem:[#allocation8 + $0xa8] sm:$0xff]
    %v323 = vld [vmem:[#allocation8 + $0xb0] sm:$0xf]
    %v324 = vld [vmem:[#allocation8 + $0xb4] sm:$0xff]
    %v325 = vld [vmem:[#allocation8 + $0xbc] sm:$0xf]
    %v326 = vld [vmem:[%s6] sm:$0x7]
    %v328 = vlaneseq
    %v329 = vshrl.u32 %v328, 7
    %v330 = vsub.s32 0, %v329
    %v331 = vrot.slane %v326, %v330
    %v332 = vlaneseq
    %v333 = vshrl.u32 %v332, 7
    %v334 = vsub.s32 1, %v333
    %v335 = vrot.slane %v326, %v334
    %v336 = vlaneseq
    %v337 = vshrl.u32 %v336, 7
    %v338 = vsub.s32 2, %v337
    %v339 = vrot.slane %v326, %v338
    %v346 = vunpack.c.l.b16 %v291
    %v347 = vunpack.c.l.b16 %v292
    %v348 = vunpack.c.l.b16 %v293
    %v349 = vpack.c.b16 %v347, %v346
    %v350 = vpack.c.b16 %v348, %v348
    %v385 = vunpack.c.l.b16 %v294
    %v386 = vunpack.c.h.b16 %v294
    %v387 = vunpack.c.l.b16 %v295
    %v388 = vunpack.c.l.b16 %v296
    %v389 = vunpack.c.h.b16 %v296
    %v390 = vunpack.c.l.b16 %v297
    %v391 = vunpack.c.l.b16 %v298
    %v392 = vunpack.c.h.b16 %v298
    %v393 = vunpack.c.l.b16 %v299
    %v394 = vunpack.c.l.b16 %v300
    %v395 = vunpack.c.h.b16 %v300
    %v396 = vunpack.c.l.b16 %v301
    %v397 = vunpack.c.l.b16 %v302
    %v398 = vunpack.c.h.b16 %v302
    %v399 = vunpack.c.l.b16 %v303
    %v400 = vunpack.c.l.b16 %v304
    %v401 = vunpack.c.h.b16 %v304
    %v402 = vunpack.c.l.b16 %v305
    %v403 = vunpack.c.l.b16 %v306
    %v404 = vunpack.c.h.b16 %v306
    %v405 = vunpack.c.l.b16 %v307
    %v406 = vunpack.c.l.b16 %v308
    %v407 = vunpack.c.h.b16 %v308
    %v408 = vunpack.c.l.b16 %v309
    %v409 = vunpack.c.l.b16 %v310
    %v410 = vunpack.c.h.b16 %v310
    %v411 = vunpack.c.l.b16 %v311
    %v412 = vunpack.c.l.b16 %v312
    %v413 = vunpack.c.h.b16 %v312
    %v414 = vunpack.c.l.b16 %v313
    %v415 = vunpack.c.l.b16 %v314
    %v416 = vunpack.c.h.b16 %v314
    %v417 = vunpack.c.l.b16 %v315
    %v418 = vunpack.c.l.b16 %v316
    %v419 = vunpack.c.h.b16 %v316
    %v420 = vunpack.c.l.b16 %v317
    %v421 = vunpack.c.l.b16 %v318
    %v422 = vunpack.c.h.b16 %v318
    %v423 = vunpack.c.l.b16 %v319
    %v424 = vunpack.c.l.b16 %v320
    %v425 = vunpack.c.h.b16 %v320
    %v426 = vunpack.c.l.b16 %v321
    %v427 = vunpack.c.l.b16 %v322
    %v428 = vunpack.c.h.b16 %v322
    %v429 = vunpack.c.l.b16 %v323
    %v430 = vunpack.c.l.b16 %v324
    %v431 = vunpack.c.h.b16 %v324
    %v432 = vunpack.c.l.b16 %v325
    %v433 = vpack.c.b16 %v388, %v385
    %v434 = vpack.c.b16 %v389, %v386
    %v435 = vpack.c.b16 %v390, %v387
    %v436 = vpack.c.b16 %v394, %v391
    %v437 = vpack.c.b16 %v395, %v392
    %v438 = vpack.c.b16 %v396, %v393
    %v439 = vpack.c.b16 %v400, %v397
    %v440 = vpack.c.b16 %v401, %v398
    %v441 = vpack.c.b16 %v402, %v399
    %v442 = vpack.c.b16 %v406, %v403
    %v443 = vpack.c.b16 %v407, %v404
    %v444 = vpack.c.b16 %v408, %v405
    %v445 = vpack.c.b16 %v412, %v409
    %v446 = vpack.c.b16 %v413, %v410
    %v447 = vpack.c.b16 %v414, %v411
    %v448 = vpack.c.b16 %v418, %v415
    %v449 = vpack.c.b16 %v419, %v416
    %v450 = vpack.c.b16 %v420, %v417
    %v451 = vpack.c.b16 %v424, %v421
    %v452 = vpack.c.b16 %v425, %v422
    %v453 = vpack.c.b16 %v426, %v423
    %v454 = vpack.c.b16 %v430, %v427
    %v455 = vpack.c.b16 %v431, %v428
    %v456 = vpack.c.b16 %v432, %v429
    %481 = vmatprep.subr.bf16.mxu0 %v455
    %482 = vmatpush1.bf16.msra.mxu0 %v454
    %483 = vmatprep.subr.bf16.mxu0 %v452
    %484 = vmatpush1.bf16.msra.mxu0 %v451
    %485 = vmatprep.subr.bf16.mxu0 %v449
    %486 = vmatpush1.bf16.msra.mxu0 %v448
    %487 = vmatprep.subr.bf16.mxu0 %v446
    %488 = vmatpush1.bf16.msra.mxu0 %v445
    %489 = vmatprep.subr.bf16.mxu0 %v443
    %490 = vmatpush1.bf16.msra.mxu0 %v442
    %491 = vmatprep.subr.bf16.mxu0 %v440
    %492 = vmatpush1.bf16.msra.mxu0 %v439
    %493 = vmatprep.subr.bf16.mxu0 %v437
    %494 = vmatpush1.bf16.msra.mxu0 %v436
    %495 = vmatprep.subr.bf16.mxu0 %v434
    %496 = vmatpush1.bf16.msra.mxu0 %v433
    %497 = vmatprep.subr.bf16.mxu0 0
    %498 = vmatpush2.bf16.msra.mxu0 0
    %499 = vmatprep.subr.bf16.mxu0 0
    %500 = vmatpush2.bf16.msra.mxu0 0
    %501 = vmatprep.subr.bf16.mxu0 0
    %502 = vmatpush2.bf16.msra.mxu0 0
    %503 = vmatprep.subr.bf16.mxu0 0
    %504 = vmatpush2.bf16.msra.mxu0 0
    %505 = vmatprep.subr.bf16.mxu0 0
    %506 = vmatpush2.bf16.msra.mxu0 0
    %507 = vmatprep.subr.bf16.mxu0 0
    %508 = vmatpush2.bf16.msra.mxu0 0
    %509 = vmatprep.subr.bf16.mxu0 0
    %510 = vmatpush2.bf16.msra.mxu0 0
    %511 = vmatprep.subr.bf16.mxu0 0
    %512 = vmatpush2.bf16.msra.mxu0 0
    %513 = vmatprep.mubr.bf16.mxu0 0
    %514 = vmatmul.mubr.bf16.gmra.mxu0 %v349
    %v515 = vpop.f32.mrf.mxu0
    %v516 = vadd.f32 %v331, %v515
    %v517 = vpop.f32.mrf.mxu0
    %v518 = vadd.f32 %v335, %v517
    %v519 = vpop.f32.mrf.mxu0
    %v520 = vadd.f32 %v331, %v519
    %v521 = vpop.f32.mrf.mxu0
    %v522 = vadd.f32 %v335, %v521
    %523 = vmatprep.mubr.bf16.mxu0 0
    %524 = vmatmul.mubr.bf16.gmra.mxu0 %v350
    %v525 = vpop.f32.mrf.mxu0
    %v526 = vadd.f32 %v331, %v525
    %v527 = vpop.f32.mrf.mxu0
    %v528 = vadd.f32 %v335, %v527
    %v529 = vpop.f32.mrf.mxu0
    %v530 = vpop.f32.mrf.mxu0
    %531 = vdwg.mxu0
    %532 = vmatprep.subr.bf16.mxu0 0
    %533 = vmatpush1.bf16.msra.mxu0 %v456
    %534 = vmatprep.subr.bf16.mxu0 0
    %535 = vmatpush1.bf16.msra.mxu0 %v453
    %536 = vmatprep.subr.bf16.mxu0 0
    %537 = vmatpush1.bf16.msra.mxu0 %v450
    %538 = vmatprep.subr.bf16.mxu0 0
    %539 = vmatpush1.bf16.msra.mxu0 %v447
    %540 = vmatprep.subr.bf16.mxu0 0
    %541 = vmatpush1.bf16.msra.mxu0 %v444
    %542 = vmatprep.subr.bf16.mxu0 0
    %543 = vmatpush1.bf16.msra.mxu0 %v441
    %544 = vmatprep.subr.bf16.mxu0 0
    %545 = vmatpush1.bf16.msra.mxu0 %v438
    %546 = vmatprep.subr.bf16.mxu0 0
    %547 = vmatpush1.bf16.msra.mxu0 %v435
    %548 = vmatprep.subr.bf16.mxu0 0
    %549 = vmatpush2.bf16.msra.mxu0 0
    %550 = vmatprep.subr.bf16.mxu0 0
    %551 = vmatpush2.bf16.msra.mxu0 0
    %552 = vmatprep.subr.bf16.mxu0 0
    %553 = vmatpush2.bf16.msra.mxu0 0
    %554 = vmatprep.subr.bf16.mxu0 0
    %555 = vmatpush2.bf16.msra.mxu0 0
    %556 = vmatprep.subr.bf16.mxu0 0
    %557 = vmatpush2.bf16.msra.mxu0 0
    %558 = vmatprep.subr.bf16.mxu0 0
    %559 = vmatpush2.bf16.msra.mxu0 0
    %560 = vmatprep.subr.bf16.mxu0 0
    %561 = vmatpush2.bf16.msra.mxu0 0
    %562 = vmatprep.subr.bf16.mxu0 0
    %563 = vmatpush2.bf16.msra.mxu0 0
    %564 = vmatprep.mubr.bf16.mxu0 0
    %565 = vmatmul.mubr.bf16.gmra.mxu0 %v349
    %v566 = vpop.f32.mrf.mxu0
    %v567 = vadd.f32 %v339, %v566
    %v568 = vpop.f32.mrf.mxu0
    %v569 = vpop.f32.mrf.mxu0
    %v570 = vadd.f32 %v339, %v569
    %v571 = vpop.f32.mrf.mxu0
    %572 = vmatprep.mubr.bf16.mxu0 0
    %573 = vmatmul.mubr.bf16.gmra.mxu0 %v350
    %v574 = vpop.f32.mrf.mxu0
    %v575 = vadd.f32 %v339, %v574
    %v576 = vpop.f32.mrf.mxu0
    %v577 = vpop.f32.mrf.mxu0
    %v578 = vpop.f32.mrf.mxu0
    %579 = vdwg.mxu0
    %v580 = vpack.c.bf16 %v520, %v516
    %v581 = vpack.c.bf16 %v522, %v518
    %v582 = vpack.c.bf16 %v570, %v567
    %v583 = vpack.c.bf16 %v526, %v526
    %v584 = vpack.c.bf16 %v528, %v528
    %v585 = vpack.c.bf16 %v575, %v575
    %v592 = vunpack.c.l.b16 %v580
    %v593 = vunpack.c.l.b16 %v581
    %v594 = vunpack.c.l.b16 %v582
    %v595 = vunpack.c.h.b16 %v580
    %v596 = vunpack.c.h.b16 %v581
    %v597 = vunpack.c.h.b16 %v582
    %v598 = vunpack.c.l.b16 %v583
    %v599 = vunpack.c.l.b16 %v584
    %v600 = vunpack.c.l.b16 %v585
    %v601 = vpack.c.b16 %v593, %v592
    %v602 = vpack.c.b16 %v594, %v594
    %v603 = vpack.c.b16 %v596, %v595
    %v604 = vpack.c.b16 %v597, %v597
    %v605 = vpack.c.b16 %v599, %v598
    %v606 = vpack.c.b16 %v600, %v600
    %613 = vst [vmem:[#allocation9] sm:$0xff] %v601
    %614 = vst [vmem:[#allocation9 + $0x8] sm:$0xf] %v602
    %615 = vst [vmem:[#allocation9 + $0xc] sm:$0xff] %v603
    %616 = vst [vmem:[#allocation9 + $0x14] sm:$0xf] %v604
    %617 = vst [vmem:[#allocation9 + $0x18] sm:$0xff] %v605
    %618 = vst [vmem:[#allocation9 + $0x20] sm:$0xf] %v606
    // Predicated region
    $region46: #{tpu_custom_call.1} parent=1 // pred_check
      _
    $region47: #{tpu_custom_call.1} parent=1 // pred_check_branch
      %620 = sbr.rel (0) target = $region49
    $region48: #{tpu_custom_call.1} parent=1 // pred_region
      %s622 = ssub.s32 576, 576
      %623 = vsyncadd [#allocation5], %s622
      %s624 = sshll.u32 [#allocation9], 4
      %s625 = int_to_ptr.vmem [resolvable:$true] %s624
      %630 = dma.vmem_to_hbm [thread:$0]  %s625, 576, %s7, [#allocation5], 192, 192, 12
    $region49: #{tpu_custom_call.1} parent=1 // pred_fallthru
      _
    // Predicated region
    $region50: #{tpu_custom_call.1} parent=1 // pred_check
      _
    $region51: #{tpu_custom_call.1} parent=1 // pred_check_branch
      %632 = sbr.rel (0) target = $region53
    $region52: #{tpu_custom_call.1} parent=1 // pred_region
      %633 = dma.done [#allocation5], 576
    $region53: #{tpu_custom_call.1} parent=1 // pred_fallthru
      _
    %634 = vsyncpa [#allocation4], 1
    %635 = vsyncpa [#allocation7], 1
    %636 = vsyncpa [#allocation5], 1

</llo_original>
